<compile_context>
chip_gen: v7x
topology: tpu7x:2x2x1
jax: 0.10.0
libtpu: 0.0.40
codegen_flags: <defaults>
</compile_context>

<pallas_src>
import jax
import jax.numpy as jnp
from jax.experimental import pallas as pl
from jax.experimental.pallas import tpu as pltpu


def _gru_classifier_kernel(gi_ref, w_h_ref, aux_ref, b_fc_ref, out_ref):
    """Fused GRU recurrence + FC for one batch tile, batch-on-lanes layout.

    gi_ref  : (T, 3H, Bt) f32 input-side gate preactivations
              (x_t @ W_i^T with b_r, b_z, b_in already folded in).
    w_h_ref : (3H, H) fused hidden weights [W_hr; W_hz; W_hn].
    aux_ref : (H, 2)  column 0 = b_hn (hidden bias of n gate), column 1 = w_fc.
    b_fc_ref: (1, 1)  FC bias.
    out_ref : (1, Bt) probabilities (lane-dense output block).
    """
    T, threeH, Bt = gi_ref.shape
    H = threeH // 3

    w_h = w_h_ref[...]                                   # (3H, H), resident
    aux = aux_ref[...]                                   # (H, 2)
    # Only bias touched per step; broadcast ONCE to a dense (H, Bt) tile
    # (2 vregs at Bt=128) so the unrolled loop does plain VPU adds.
    b_hn = jnp.broadcast_to(aux[:, 0:1], (H, Bt))
    w_fc = aux[:, 1:2]                                   # (H, 1)

    def step(t, h):
        gi_t = gi_ref[t]                                 # (3H, Bt)
        # One fused MXU matmul on the serial h-dependence chain.
        gh = jnp.dot(w_h, h, preferred_element_type=jnp.float32)   # (3H, Bt)
        # One EUP sigmoid over the contiguous r|z slice (2H sublanes).
        rz = jax.nn.sigmoid(gi_t[:2 * H] + gh[:2 * H])
        r = rz[:H]
        z = rz[H:]
        n = jnp.tanh(gi_t[2 * H:] + r * (gh[2 * H:] + b_hn))
        return (1.0 - z) * n + z * h

    h0 = jnp.zeros((H, Bt), jnp.float32)
    h = jax.lax.fori_loop(0, T, step, h0, unroll=True)

    # Final FC once per tile: VPU multiply + sublane reduce -> lane-dense (1, Bt).
    logits = jnp.sum(h * w_fc, axis=0, keepdims=True) + b_fc_ref[...]
    out_ref[...] = jax.nn.sigmoid(logits)


def _pack_kernel_params(params):
    """Fold PyTorch-style GRU params into the kernel-friendly packed layout."""
    w_ih = params["w_ih"]          # (3H, E)  rows: [r | z | n]
    w_hh = params["w_hh"]          # (3H, H)
    b_ih = params["b_ih"]          # (3H,)
    b_hh = params["b_hh"]          # (3H,)
    H = w_hh.shape[1]

    # Input-side biases: r/z gates can absorb both b_ih and b_hh halves; the n
    # gate keeps only b_ih (b_hh_n is multiplied by r inside the kernel).
    b_i = jnp.concatenate([b_ih[:2 * H] + b_hh[:2 * H], b_ih[2 * H:]])   # (3H,)

    # Pre-project the embedding table: gathering a row of table_proj yields the
    # exact per-token input preactivation x_t @ W_i^T + b_i (bit-for-bit the
    # same as projecting after the gather).
    table_proj = jnp.dot(params["embedding"], w_ih.T,
                         precision=jax.lax.Precision.HIGHEST) + b_i[None, :]

    aux = jnp.stack([b_hh[2 * H:], params["w_fc"].reshape(H)], axis=1)   # (H, 2)

    return {
        "table_proj": table_proj,                 # (V+1, 3H)
        "w_h": w_hh,                              # (3H, H): gh = W_h @ h, h as (H, Bt)
        "aux": aux,                               # (H, 2): [b_hn | w_fc]
        "b_fc": params["b_fc"].reshape(1, 1),     # (1, 1)
    }


def url_classifier_forward(tokens, params):
    """tokens: int32 (B, T).  Returns probabilities of shape (B,)."""
    kp = _pack_kernel_params(params)
    B, T = tokens.shape
    H = kp["w_h"].shape[1]

    # Batch lives on the lane axis -> pad to a multiple of 128 (lane width).
    B_pad = -(-B // 128) * 128
    # 256-wide tiles when they divide evenly (v6e/v7x 256-wide MXU), else 128.
    Bt = 256 if (B_pad % 256 == 0) else 128

    # TODO(synk): the data-dependent embedding gather stays in XLA; a pure-Pallas
    # version would need a manual-DMA gather kernel (memory_space=pl.ANY).
    tokens_tm = jnp.transpose(tokens)                           # (T, B)
    if B_pad != B:
        tokens_tm = jnp.pad(tokens_tm, ((0, 0), (0, B_pad - B)))  # pad with idx 0
    gi = jnp.take(kp["table_proj"], tokens_tm, axis=0)          # (T, B_pad, 3H)
    gi = jnp.transpose(gi, (0, 2, 1))                           # (T, 3H, B_pad)

    # TODO(synk): for long sequences, block gi over a second "arbitrary" time
    # axis (Tc, 3H, Bt) and carry h in VMEM scratch to respect v7x's 64 MiB VMEM.
    out = pl.pallas_call(
        _gru_classifier_kernel,
        out_shape=jax.ShapeDtypeStruct((1, B_pad), jnp.float32),
        grid_spec=pltpu.PrefetchScalarGridSpec(
            num_scalar_prefetch=0,
            grid=(B_pad // Bt,),                                # batch tiles only
            in_specs=[
                pl.BlockSpec((T, 3 * H, Bt), lambda b: (0, 0, b)),  # preactivations
                pl.BlockSpec((3 * H, H), lambda b: (0, 0)),         # fused W_h
                pl.BlockSpec((H, 2), lambda b: (0, 0)),             # [b_hn | w_fc]
                pl.BlockSpec((1, 1), lambda b: (0, 0)),             # b_fc
            ],
            out_specs=pl.BlockSpec((1, Bt), lambda b: (0, b)),      # lane-dense
        ),
        compiler_params=pltpu.CompilerParams(
            # Independent batch tiles -> spread across TensorCores when grid > 1.
            dimension_semantics=("parallel",),
        ),
    )(gi, kp["w_h"], kp["aux"], kp["b_fc"])

    return out[0, :B]                                           # prob.squeeze(1)


def init_params(key, vocab_size, embedding_dim=32, hidden_dim=16):
    """Deterministic init mirroring the PyTorch module's parameter shapes."""
    k0, k1, k2, k3, k4, k5, k6 = jax.random.split(key, 7)
    V, E, H = vocab_size, embedding_dim, hidden_dim
    bound = 1.0 / jnp.sqrt(H)

    emb = jax.random.normal(k0, (V + 1, E), jnp.float32)
    emb = emb.at[0].set(0.0)                                    # padding_idx=0

    return {
        "embedding": emb,
        "w_ih": jax.random.uniform(k1, (3 * H, E), jnp.float32, -bound, bound),
        "w_hh": jax.random.uniform(k2, (3 * H, H), jnp.float32, -bound, bound),
        "b_ih": jax.random.uniform(k3, (3 * H,), jnp.float32, -bound, bound),
        "b_hh": jax.random.uniform(k4, (3 * H,), jnp.float32, -bound, bound),
        "w_fc": jax.random.uniform(k5, (1, H), jnp.float32, -bound, bound),
        "b_fc": jax.random.uniform(k6, (1,), jnp.float32, -bound, bound),
    }


def _reference_forward(tokens, params):
    """Pure-JAX reference of the PyTorch forward (for sanity checking)."""
    hp = jax.lax.Precision.HIGHEST
    emb = jnp.take(params["embedding"], tokens, axis=0)         # (B, T, E)
    w_ih, w_hh = params["w_ih"], params["w_hh"]
    b_ih, b_hh = params["b_ih"], params["b_hh"]
    B, T, _ = emb.shape
    H = w_hh.shape[1]
    h = jnp.zeros((B, H), jnp.float32)
    for t in range(T):
        gi = jnp.dot(emb[:, t, :], w_ih.T, precision=hp) + b_ih
        gh = jnp.dot(h, w_hh.T, precision=hp) + b_hh
        r = jax.nn.sigmoid(gi[:, :H] + gh[:, :H])
        z = jax.nn.sigmoid(gi[:, H:2 * H] + gh[:, H:2 * H])
        n = jnp.tanh(gi[:, 2 * H:] + r * gh[:, 2 * H:])
        h = (1.0 - z) * n + z * h
    logits = jnp.dot(h, params["w_fc"].T, precision=hp) + params["b_fc"]
    return jax.nn.sigmoid(logits)[:, 0]


if __name__ == "__main__":
    VOCAB = 64
    B, T = 2, 8
    E, H = 32, 16

    key = jax.random.PRNGKey(0)
    kp_key, kx = jax.random.split(key)
    params = init_params(kp_key, VOCAB, E, H)

    # Token ids in [0, VOCAB]; include some padding (0) tokens.
    tokens = jax.random.randint(kx, (B, T), 0, VOCAB + 1, dtype=jnp.int32)

    probs = url_classifier_forward(tokens, params)
    probs = jax.block_until_ready(probs)

    ref = _reference_forward(tokens, params)
    assert probs.shape == (B,)
    assert jnp.allclose(probs, ref, rtol=1e-4, atol=1e-4), (probs, ref)

    print("KERNEL_OK")
</pallas_src>

<mosaic_0001>
module attributes {stable_mosaic.version = 11 : i64} {
  func.func @_gru_classifier_kernel(%arg0: i32, %arg1: memref<8x48x128xf32, #tpu.memory_space<vmem>>, %arg2: memref<48x16xf32, #tpu.memory_space<vmem>>, %arg3: memref<16x2xf32, #tpu.memory_space<vmem>>, %arg4: memref<1x1xf32, #tpu.memory_space<vmem>>, %arg5: memref<1x128xf32, #tpu.memory_space<vmem>>) attributes {dimension_semantics = [#tpu.dimension_semantics<parallel>], iteration_bounds = array<i64: 1>, scalar_prefetch = 0 : i64, scratch_operands = 0 : i64, tpu.core_type = #tpu.core_type<tc>, window_params = [{transform_indices = @transform_0, window_bounds = array<i64: 8, 48, 128>}, {pipeline_mode = #tpu.pipeline_mode<synchronous>, transform_indices = @transform_1, window_bounds = array<i64: 48, 16>}, {pipeline_mode = #tpu.pipeline_mode<synchronous>, transform_indices = @transform_2, window_bounds = array<i64: 16, 2>}, {pipeline_mode = #tpu.pipeline_mode<synchronous>, transform_indices = @transform_3, window_bounds = array<i64: 1, 1>}, {transform_indices = @transform_4, window_bounds = array<i64: 1, 128>}]} {
    %c0 = arith.constant 0 : index
    %c0_0 = arith.constant 0 : index
    %0 = vector.load %arg2[%c0, %c0_0] : memref<48x16xf32, #tpu.memory_space<vmem>>, vector<48x16xf32>
    %c0_1 = arith.constant 0 : index
    %c0_2 = arith.constant 0 : index
    %1 = vector.load %arg3[%c0_1, %c0_2] : memref<16x2xf32, #tpu.memory_space<vmem>>, vector<16x2xf32>
    %2 = vector.extract_strided_slice %1 {offsets = [0, 0], sizes = [16, 1], strides = [1, 1]} : vector<16x2xf32> to vector<16x1xf32>
    %3 = vector.shape_cast %2 : vector<16x1xf32> to vector<16x1xf32>
    %4 = vector.broadcast %3 : vector<16x1xf32> to vector<16x128xf32>
    %5 = vector.extract_strided_slice %1 {offsets = [0, 1], sizes = [16, 1], strides = [1, 1]} : vector<16x2xf32> to vector<16x1xf32>
    %cst = arith.constant 0.000000e+00 : f32
    %6 = vector.broadcast %cst : f32 to vector<16x128xf32>
    %c0_i32 = arith.constant 0 : i32
    %7 = arith.index_cast %c0_i32 : i32 to index
    %c0_3 = arith.constant 0 : index
    %c0_4 = arith.constant 0 : index
    %8 = vector.load %arg1[%7, %c0_3, %c0_4] : memref<8x48x128xf32, #tpu.memory_space<vmem>>, vector<1x48x128xf32>
    %9 = vector.shape_cast %8 : vector<1x48x128xf32> to vector<48x128xf32>
    %cst_5 = arith.constant dense<0.000000e+00> : vector<48x128xf32>
    %10 = tpu.matmul %0, %6, %cst_5 {dimension_numbers = #tpu.dot_dimension_numbers<[1], [0], [0], [1], [0, 0, 1, 1], [], []>} : vector<48x16xf32>, vector<16x128xf32>, vector<48x128xf32> -> vector<48x128xf32>
    %11 = vector.extract_strided_slice %9 {offsets = [0, 0], sizes = [32, 128], strides = [1, 1]} : vector<48x128xf32> to vector<32x128xf32>
    %12 = vector.extract_strided_slice %10 {offsets = [0, 0], sizes = [32, 128], strides = [1, 1]} : vector<48x128xf32> to vector<32x128xf32>
    %13 = arith.addf %11, %12 : vector<32x128xf32>
    %14 = arith.negf %13 : vector<32x128xf32>
    %15 = math.exp %14 : vector<32x128xf32>
    %cst_6 = arith.constant 1.000000e+00 : f32
    %16 = vector.broadcast %cst_6 : f32 to vector<32x128xf32>
    %17 = arith.addf %16, %15 : vector<32x128xf32>
    %18 = arith.divf %16, %17 : vector<32x128xf32>
    %19 = vector.extract_strided_slice %18 {offsets = [0, 0], sizes = [16, 128], strides = [1, 1]} : vector<32x128xf32> to vector<16x128xf32>
    %20 = vector.extract_strided_slice %18 {offsets = [16, 0], sizes = [16, 128], strides = [1, 1]} : vector<32x128xf32> to vector<16x128xf32>
    %21 = vector.extract_strided_slice %9 {offsets = [32, 0], sizes = [16, 128], strides = [1, 1]} : vector<48x128xf32> to vector<16x128xf32>
    %22 = vector.extract_strided_slice %10 {offsets = [32, 0], sizes = [16, 128], strides = [1, 1]} : vector<48x128xf32> to vector<16x128xf32>
    %23 = arith.addf %22, %4 : vector<16x128xf32>
    %24 = arith.mulf %19, %23 : vector<16x128xf32>
    %25 = arith.addf %21, %24 : vector<16x128xf32>
    %26 = math.tanh %25 : vector<16x128xf32>
    %cst_7 = arith.constant 1.000000e+00 : f32
    %27 = vector.broadcast %cst_7 : f32 to vector<16x128xf32>
    %28 = arith.subf %27, %20 : vector<16x128xf32>
    %29 = arith.mulf %28, %26 : vector<16x128xf32>
    %30 = arith.mulf %20, %6 : vector<16x128xf32>
    %31 = arith.addf %29, %30 : vector<16x128xf32>
    %c1_i32 = arith.constant 1 : i32
    %32 = arith.index_cast %c1_i32 : i32 to index
    %c0_8 = arith.constant 0 : index
    %c0_9 = arith.constant 0 : index
    %33 = vector.load %arg1[%32, %c0_8, %c0_9] : memref<8x48x128xf32, #tpu.memory_space<vmem>>, vector<1x48x128xf32>
    %34 = vector.shape_cast %33 : vector<1x48x128xf32> to vector<48x128xf32>
    %cst_10 = arith.constant dense<0.000000e+00> : vector<48x128xf32>
    %35 = tpu.matmul %0, %31, %cst_10 {dimension_numbers = #tpu.dot_dimension_numbers<[1], [0], [0], [1], [0, 0, 1, 1], [], []>} : vector<48x16xf32>, vector<16x128xf32>, vector<48x128xf32> -> vector<48x128xf32>
    %36 = vector.extract_strided_slice %34 {offsets = [0, 0], sizes = [32, 128], strides = [1, 1]} : vector<48x128xf32> to vector<32x128xf32>
    %37 = vector.extract_strided_slice %35 {offsets = [0, 0], sizes = [32, 128], strides = [1, 1]} : vector<48x128xf32> to vector<32x128xf32>
    %38 = arith.addf %36, %37 : vector<32x128xf32>
    %39 = arith.negf %38 : vector<32x128xf32>
    %40 = math.exp %39 : vector<32x128xf32>
    %cst_11 = arith.constant 1.000000e+00 : f32
    %41 = vector.broadcast %cst_11 : f32 to vector<32x128xf32>
    %42 = arith.addf %41, %40 : vector<32x128xf32>
    %43 = arith.divf %41, %42 : vector<32x128xf32>
    %44 = vector.extract_strided_slice %43 {offsets = [0, 0], sizes = [16, 128], strides = [1, 1]} : vector<32x128xf32> to vector<16x128xf32>
    %45 = vector.extract_strided_slice %43 {offsets = [16, 0], sizes = [16, 128], strides = [1, 1]} : vector<32x128xf32> to vector<16x128xf32>
    %46 = vector.extract_strided_slice %34 {offsets = [32, 0], sizes = [16, 128], strides = [1, 1]} : vector<48x128xf32> to vector<16x128xf32>
    %47 = vector.extract_strided_slice %35 {offsets = [32, 0], sizes = [16, 128], strides = [1, 1]} : vector<48x128xf32> to vector<16x128xf32>
    %48 = arith.addf %47, %4 : vector<16x128xf32>
    %49 = arith.mulf %44, %48 : vector<16x128xf32>
    %50 = arith.addf %46, %49 : vector<16x128xf32>
    %51 = math.tanh %50 : vector<16x128xf32>
    %cst_12 = arith.constant 1.000000e+00 : f32
    %52 = vector.broadcast %cst_12 : f32 to vector<16x128xf32>
    %53 = arith.subf %52, %45 : vector<16x128xf32>
    %54 = arith.mulf %53, %51 : vector<16x128xf32>
    %55 = arith.mulf %45, %31 : vector<16x128xf32>
    %56 = arith.addf %54, %55 : vector<16x128xf32>
    %c2_i32 = arith.constant 2 : i32
    %57 = arith.index_cast %c2_i32 : i32 to index
    %c0_13 = arith.constant 0 : index
    %c0_14 = arith.constant 0 : index
    %58 = vector.load %arg1[%57, %c0_13, %c0_14] : memref<8x48x128xf32, #tpu.memory_space<vmem>>, vector<1x48x128xf32>
    %59 = vector.shape_cast %58 : vector<1x48x128xf32> to vector<48x128xf32>
    %cst_15 = arith.constant dense<0.000000e+00> : vector<48x128xf32>
    %60 = tpu.matmul %0, %56, %cst_15 {dimension_numbers = #tpu.dot_dimension_numbers<[1], [0], [0], [1], [0, 0, 1, 1], [], []>} : vector<48x16xf32>, vector<16x128xf32>, vector<48x128xf32> -> vector<48x128xf32>
    %61 = vector.extract_strided_slice %59 {offsets = [0, 0], sizes = [32, 128], strides = [1, 1]} : vector<48x128xf32> to vector<32x128xf32>
    %62 = vector.extract_strided_slice %60 {offsets = [0, 0], sizes = [32, 128], strides = [1, 1]} : vector<48x128xf32> to vector<32x128xf32>
    %63 = arith.addf %61, %62 : vector<32x128xf32>
    %64 = arith.negf %63 : vector<32x128xf32>
    %65 = math.exp %64 : vector<32x128xf32>
    %cst_16 = arith.constant 1.000000e+00 : f32
    %66 = vector.broadcast %cst_16 : f32 to vector<32x128xf32>
    %67 = arith.addf %66, %65 : vector<32x128xf32>
    %68 = arith.divf %66, %67 : vector<32x128xf32>
    %69 = vector.extract_strided_slice %68 {offsets = [0, 0], sizes = [16, 128], strides = [1, 1]} : vector<32x128xf32> to vector<16x128xf32>
    %70 = vector.extract_strided_slice %68 {offsets = [16, 0], sizes = [16, 128], strides = [1, 1]} : vector<32x128xf32> to vector<16x128xf32>
    %71 = vector.extract_strided_slice %59 {offsets = [32, 0], sizes = [16, 128], strides = [1, 1]} : vector<48x128xf32> to vector<16x128xf32>
    %72 = vector.extract_strided_slice %60 {offsets = [32, 0], sizes = [16, 128], strides = [1, 1]} : vector<48x128xf32> to vector<16x128xf32>
    %73 = arith.addf %72, %4 : vector<16x128xf32>
    %74 = arith.mulf %69, %73 : vector<16x128xf32>
    %75 = arith.addf %71, %74 : vector<16x128xf32>
    %76 = math.tanh %75 : vector<16x128xf32>
    %cst_17 = arith.constant 1.000000e+00 : f32
    %77 = vector.broadcast %cst_17 : f32 to vector<16x128xf32>
    %78 = arith.subf %77, %70 : vector<16x128xf32>
    %79 = arith.mulf %78, %76 : vector<16x128xf32>
    %80 = arith.mulf %70, %56 : vector<16x128xf32>
    %81 = arith.addf %79, %80 : vector<16x128xf32>
    %c3_i32 = arith.constant 3 : i32
    %82 = arith.index_cast %c3_i32 : i32 to index
    %c0_18 = arith.constant 0 : index
    %c0_19 = arith.constant 0 : index
    %83 = vector.load %arg1[%82, %c0_18, %c0_19] : memref<8x48x128xf32, #tpu.memory_space<vmem>>, vector<1x48x128xf32>
    %84 = vector.shape_cast %83 : vector<1x48x128xf32> to vector<48x128xf32>
    %cst_20 = arith.constant dense<0.000000e+00> : vector<48x128xf32>
    %85 = tpu.matmul %0, %81, %cst_20 {dimension_numbers = #tpu.dot_dimension_numbers<[1], [0], [0], [1], [0, 0, 1, 1], [], []>} : vector<48x16xf32>, vector<16x128xf32>, vector<48x128xf32> -> vector<48x128xf32>
    %86 = vector.extract_strided_slice %84 {offsets = [0, 0], sizes = [32, 128], strides = [1, 1]} : vector<48x128xf32> to vector<32x128xf32>
    %87 = vector.extract_strided_slice %85 {offsets = [0, 0], sizes = [32, 128], strides = [1, 1]} : vector<48x128xf32> to vector<32x128xf32>
    %88 = arith.addf %86, %87 : vector<32x128xf32>
    %89 = arith.negf %88 : vector<32x128xf32>
    %90 = math.exp %89 : vector<32x128xf32>
    %cst_21 = arith.constant 1.000000e+00 : f32
    %91 = vector.broadcast %cst_21 : f32 to vector<32x128xf32>
    %92 = arith.addf %91, %90 : vector<32x128xf32>
    %93 = arith.divf %91, %92 : vector<32x128xf32>
    %94 = vector.extract_strided_slice %93 {offsets = [0, 0], sizes = [16, 128], strides = [1, 1]} : vector<32x128xf32> to vector<16x128xf32>
    %95 = vector.extract_strided_slice %93 {offsets = [16, 0], sizes = [16, 128], strides = [1, 1]} : vector<32x128xf32> to vector<16x128xf32>
    %96 = vector.extract_strided_slice %84 {offsets = [32, 0], sizes = [16, 128], strides = [1, 1]} : vector<48x128xf32> to vector<16x128xf32>
    %97 = vector.extract_strided_slice %85 {offsets = [32, 0], sizes = [16, 128], strides = [1, 1]} : vector<48x128xf32> to vector<16x128xf32>
    %98 = arith.addf %97, %4 : vector<16x128xf32>
    %99 = arith.mulf %94, %98 : vector<16x128xf32>
    %100 = arith.addf %96, %99 : vector<16x128xf32>
    %101 = math.tanh %100 : vector<16x128xf32>
    %cst_22 = arith.constant 1.000000e+00 : f32
    %102 = vector.broadcast %cst_22 : f32 to vector<16x128xf32>
    %103 = arith.subf %102, %95 : vector<16x128xf32>
    %104 = arith.mulf %103, %101 : vector<16x128xf32>
    %105 = arith.mulf %95, %81 : vector<16x128xf32>
    %106 = arith.addf %104, %105 : vector<16x128xf32>
    %c4_i32 = arith.constant 4 : i32
    %107 = arith.index_cast %c4_i32 : i32 to index
    %c0_23 = arith.constant 0 : index
    %c0_24 = arith.constant 0 : index
    %108 = vector.load %arg1[%107, %c0_23, %c0_24] : memref<8x48x128xf32, #tpu.memory_space<vmem>>, vector<1x48x128xf32>
    %109 = vector.shape_cast %108 : vector<1x48x128xf32> to vector<48x128xf32>
    %cst_25 = arith.constant dense<0.000000e+00> : vector<48x128xf32>
    %110 = tpu.matmul %0, %106, %cst_25 {dimension_numbers = #tpu.dot_dimension_numbers<[1], [0], [0], [1], [0, 0, 1, 1], [], []>} : vector<48x16xf32>, vector<16x128xf32>, vector<48x128xf32> -> vector<48x128xf32>
    %111 = vector.extract_strided_slice %109 {offsets = [0, 0], sizes = [32, 128], strides = [1, 1]} : vector<48x128xf32> to vector<32x128xf32>
    %112 = vector.extract_strided_slice %110 {offsets = [0, 0], sizes = [32, 128], strides = [1, 1]} : vector<48x128xf32> to vector<32x128xf32>
    %113 = arith.addf %111, %112 : vector<32x128xf32>
    %114 = arith.negf %113 : vector<32x128xf32>
    %115 = math.exp %114 : vector<32x128xf32>
    %cst_26 = arith.constant 1.000000e+00 : f32
    %116 = vector.broadcast %cst_26 : f32 to vector<32x128xf32>
    %117 = arith.addf %116, %115 : vector<32x128xf32>
    %118 = arith.divf %116, %117 : vector<32x128xf32>
    %119 = vector.extract_strided_slice %118 {offsets = [0, 0], sizes = [16, 128], strides = [1, 1]} : vector<32x128xf32> to vector<16x128xf32>
    %120 = vector.extract_strided_slice %118 {offsets = [16, 0], sizes = [16, 128], strides = [1, 1]} : vector<32x128xf32> to vector<16x128xf32>
    %121 = vector.extract_strided_slice %109 {offsets = [32, 0], sizes = [16, 128], strides = [1, 1]} : vector<48x128xf32> to vector<16x128xf32>
    %122 = vector.extract_strided_slice %110 {offsets = [32, 0], sizes = [16, 128], strides = [1, 1]} : vector<48x128xf32> to vector<16x128xf32>
    %123 = arith.addf %122, %4 : vector<16x128xf32>
    %124 = arith.mulf %119, %123 : vector<16x128xf32>
    %125 = arith.addf %121, %124 : vector<16x128xf32>
    %126 = math.tanh %125 : vector<16x128xf32>
    %cst_27 = arith.constant 1.000000e+00 : f32
    %127 = vector.broadcast %cst_27 : f32 to vector<16x128xf32>
    %128 = arith.subf %127, %120 : vector<16x128xf32>
    %129 = arith.mulf %128, %126 : vector<16x128xf32>
    %130 = arith.mulf %120, %106 : vector<16x128xf32>
    %131 = arith.addf %129, %130 : vector<16x128xf32>
    %c5_i32 = arith.constant 5 : i32
    %132 = arith.index_cast %c5_i32 : i32 to index
    %c0_28 = arith.constant 0 : index
    %c0_29 = arith.constant 0 : index
    %133 = vector.load %arg1[%132, %c0_28, %c0_29] : memref<8x48x128xf32, #tpu.memory_space<vmem>>, vector<1x48x128xf32>
    %134 = vector.shape_cast %133 : vector<1x48x128xf32> to vector<48x128xf32>
    %cst_30 = arith.constant dense<0.000000e+00> : vector<48x128xf32>
    %135 = tpu.matmul %0, %131, %cst_30 {dimension_numbers = #tpu.dot_dimension_numbers<[1], [0], [0], [1], [0, 0, 1, 1], [], []>} : vector<48x16xf32>, vector<16x128xf32>, vector<48x128xf32> -> vector<48x128xf32>
    %136 = vector.extract_strided_slice %134 {offsets = [0, 0], sizes = [32, 128], strides = [1, 1]} : vector<48x128xf32> to vector<32x128xf32>
    %137 = vector.extract_strided_slice %135 {offsets = [0, 0], sizes = [32, 128], strides = [1, 1]} : vector<48x128xf32> to vector<32x128xf32>
    %138 = arith.addf %136, %137 : vector<32x128xf32>
    %139 = arith.negf %138 : vector<32x128xf32>
    %140 = math.exp %139 : vector<32x128xf32>
    %cst_31 = arith.constant 1.000000e+00 : f32
    %141 = vector.broadcast %cst_31 : f32 to vector<32x128xf32>
    %142 = arith.addf %141, %140 : vector<32x128xf32>
    %143 = arith.divf %141, %142 : vector<32x128xf32>
    %144 = vector.extract_strided_slice %143 {offsets = [0, 0], sizes = [16, 128], strides = [1, 1]} : vector<32x128xf32> to vector<16x128xf32>
    %145 = vector.extract_strided_slice %143 {offsets = [16, 0], sizes = [16, 128], strides = [1, 1]} : vector<32x128xf32> to vector<16x128xf32>
    %146 = vector.extract_strided_slice %134 {offsets = [32, 0], sizes = [16, 128], strides = [1, 1]} : vector<48x128xf32> to vector<16x128xf32>
    %147 = vector.extract_strided_slice %135 {offsets = [32, 0], sizes = [16, 128], strides = [1, 1]} : vector<48x128xf32> to vector<16x128xf32>
    %148 = arith.addf %147, %4 : vector<16x128xf32>
    %149 = arith.mulf %144, %148 : vector<16x128xf32>
    %150 = arith.addf %146, %149 : vector<16x128xf32>
    %151 = math.tanh %150 : vector<16x128xf32>
    %cst_32 = arith.constant 1.000000e+00 : f32
    %152 = vector.broadcast %cst_32 : f32 to vector<16x128xf32>
    %153 = arith.subf %152, %145 : vector<16x128xf32>
    %154 = arith.mulf %153, %151 : vector<16x128xf32>
    %155 = arith.mulf %145, %131 : vector<16x128xf32>
    %156 = arith.addf %154, %155 : vector<16x128xf32>
    %c6_i32 = arith.constant 6 : i32
    %157 = arith.index_cast %c6_i32 : i32 to index
    %c0_33 = arith.constant 0 : index
    %c0_34 = arith.constant 0 : index
    %158 = vector.load %arg1[%157, %c0_33, %c0_34] : memref<8x48x128xf32, #tpu.memory_space<vmem>>, vector<1x48x128xf32>
    %159 = vector.shape_cast %158 : vector<1x48x128xf32> to vector<48x128xf32>
    %cst_35 = arith.constant dense<0.000000e+00> : vector<48x128xf32>
    %160 = tpu.matmul %0, %156, %cst_35 {dimension_numbers = #tpu.dot_dimension_numbers<[1], [0], [0], [1], [0, 0, 1, 1], [], []>} : vector<48x16xf32>, vector<16x128xf32>, vector<48x128xf32> -> vector<48x128xf32>
    %161 = vector.extract_strided_slice %159 {offsets = [0, 0], sizes = [32, 128], strides = [1, 1]} : vector<48x128xf32> to vector<32x128xf32>
    %162 = vector.extract_strided_slice %160 {offsets = [0, 0], sizes = [32, 128], strides = [1, 1]} : vector<48x128xf32> to vector<32x128xf32>
    %163 = arith.addf %161, %162 : vector<32x128xf32>
    %164 = arith.negf %163 : vector<32x128xf32>
    %165 = math.exp %164 : vector<32x128xf32>
    %cst_36 = arith.constant 1.000000e+00 : f32
    %166 = vector.broadcast %cst_36 : f32 to vector<32x128xf32>
    %167 = arith.addf %166, %165 : vector<32x128xf32>
    %168 = arith.divf %166, %167 : vector<32x128xf32>
    %169 = vector.extract_strided_slice %168 {offsets = [0, 0], sizes = [16, 128], strides = [1, 1]} : vector<32x128xf32> to vector<16x128xf32>
    %170 = vector.extract_strided_slice %168 {offsets = [16, 0], sizes = [16, 128], strides = [1, 1]} : vector<32x128xf32> to vector<16x128xf32>
    %171 = vector.extract_strided_slice %159 {offsets = [32, 0], sizes = [16, 128], strides = [1, 1]} : vector<48x128xf32> to vector<16x128xf32>
    %172 = vector.extract_strided_slice %160 {offsets = [32, 0], sizes = [16, 128], strides = [1, 1]} : vector<48x128xf32> to vector<16x128xf32>
    %173 = arith.addf %172, %4 : vector<16x128xf32>
    %174 = arith.mulf %169, %173 : vector<16x128xf32>
    %175 = arith.addf %171, %174 : vector<16x128xf32>
    %176 = math.tanh %175 : vector<16x128xf32>
    %cst_37 = arith.constant 1.000000e+00 : f32
    %177 = vector.broadcast %cst_37 : f32 to vector<16x128xf32>
    %178 = arith.subf %177, %170 : vector<16x128xf32>
    %179 = arith.mulf %178, %176 : vector<16x128xf32>
    %180 = arith.mulf %170, %156 : vector<16x128xf32>
    %181 = arith.addf %179, %180 : vector<16x128xf32>
    %c7_i32 = arith.constant 7 : i32
    %182 = arith.index_cast %c7_i32 : i32 to index
    %c0_38 = arith.constant 0 : index
    %c0_39 = arith.constant 0 : index
    %183 = vector.load %arg1[%182, %c0_38, %c0_39] : memref<8x48x128xf32, #tpu.memory_space<vmem>>, vector<1x48x128xf32>
    %184 = vector.shape_cast %183 : vector<1x48x128xf32> to vector<48x128xf32>
    %cst_40 = arith.constant dense<0.000000e+00> : vector<48x128xf32>
    %185 = tpu.matmul %0, %181, %cst_40 {dimension_numbers = #tpu.dot_dimension_numbers<[1], [0], [0], [1], [0, 0, 1, 1], [], []>} : vector<48x16xf32>, vector<16x128xf32>, vector<48x128xf32> -> vector<48x128xf32>
    %186 = vector.extract_strided_slice %184 {offsets = [0, 0], sizes = [32, 128], strides = [1, 1]} : vector<48x128xf32> to vector<32x128xf32>
    %187 = vector.extract_strided_slice %185 {offsets = [0, 0], sizes = [32, 128], strides = [1, 1]} : vector<48x128xf32> to vector<32x128xf32>
    %188 = arith.addf %186, %187 : vector<32x128xf32>
    %189 = arith.negf %188 : vector<32x128xf32>
    %190 = math.exp %189 : vector<32x128xf32>
    %cst_41 = arith.constant 1.000000e+00 : f32
    %191 = vector.broadcast %cst_41 : f32 to vector<32x128xf32>
    %192 = arith.addf %191, %190 : vector<32x128xf32>
    %193 = arith.divf %191, %192 : vector<32x128xf32>
    %194 = vector.extract_strided_slice %193 {offsets = [0, 0], sizes = [16, 128], strides = [1, 1]} : vector<32x128xf32> to vector<16x128xf32>
    %195 = vector.extract_strided_slice %193 {offsets = [16, 0], sizes = [16, 128], strides = [1, 1]} : vector<32x128xf32> to vector<16x128xf32>
    %196 = vector.extract_strided_slice %184 {offsets = [32, 0], sizes = [16, 128], strides = [1, 1]} : vector<48x128xf32> to vector<16x128xf32>
    %197 = vector.extract_strided_slice %185 {offsets = [32, 0], sizes = [16, 128], strides = [1, 1]} : vector<48x128xf32> to vector<16x128xf32>
    %198 = arith.addf %197, %4 : vector<16x128xf32>
    %199 = arith.mulf %194, %198 : vector<16x128xf32>
    %200 = arith.addf %196, %199 : vector<16x128xf32>
    %201 = math.tanh %200 : vector<16x128xf32>
    %cst_42 = arith.constant 1.000000e+00 : f32
    %202 = vector.broadcast %cst_42 : f32 to vector<16x128xf32>
    %203 = arith.subf %202, %195 : vector<16x128xf32>
    %204 = arith.mulf %203, %201 : vector<16x128xf32>
    %205 = arith.mulf %195, %181 : vector<16x128xf32>
    %206 = arith.addf %204, %205 : vector<16x128xf32>
    %c8_i32 = arith.constant 8 : i32
    %207 = vector.broadcast %5 : vector<16x1xf32> to vector<16x128xf32>
    %208 = arith.mulf %206, %207 : vector<16x128xf32>
    %cst_43 = arith.constant dense<0.000000e+00> : vector<128xf32>
    %209 = vector.multi_reduction <add>, %208, %cst_43 [0] : vector<16x128xf32> to vector<128xf32>
    %210 = vector.shape_cast %209 : vector<128xf32> to vector<1x128xf32>
    %c0_44 = arith.constant 0 : index
    %c0_45 = arith.constant 0 : index
    %211 = vector.load %arg4[%c0_44, %c0_45] : memref<1x1xf32, #tpu.memory_space<vmem>>, vector<1x1xf32>
    %212 = vector.broadcast %211 : vector<1x1xf32> to vector<1x128xf32>
    %213 = arith.addf %210, %212 : vector<1x128xf32>
    %214 = arith.negf %213 : vector<1x128xf32>
    %215 = math.exp %214 : vector<1x128xf32>
    %cst_46 = arith.constant 1.000000e+00 : f32
    %216 = vector.broadcast %cst_46 : f32 to vector<1x128xf32>
    %217 = arith.addf %216, %215 : vector<1x128xf32>
    %218 = arith.divf %216, %217 : vector<1x128xf32>
    %c0_47 = arith.constant 0 : index
    %c0_48 = arith.constant 0 : index
    %219 = vector.load %arg5[%c0_47, %c0_48] : memref<1x128xf32, #tpu.memory_space<vmem>>, vector<1x128xf32>
    tpu.vector_store %arg5[%c0_47, %c0_48], %218 {strides = array<i32>} : memref<1x128xf32, #tpu.memory_space<vmem>>, vector<1x128xf32>,
    return
  }
  func.func @transform_0(%arg0: i32) -> (i32, i32, i32) {
    %c0_i32 = arith.constant 0 : i32
    %c0_i32_0 = arith.constant 0 : i32
    %c0_i32_1 = arith.constant 0 : i32
    return %c0_i32, %c0_i32_0, %arg0 : i32, i32, i32
  }
  func.func @transform_1(%arg0: i32) -> (i32, i32) {
    %c0_i32 = arith.constant 0 : i32
    %c0_i32_0 = arith.constant 0 : i32
    %c0_i32_1 = arith.constant 0 : i32
    return %c0_i32, %c0_i32_0 : i32, i32
  }
  func.func @transform_2(%arg0: i32) -> (i32, i32) {
    %c0_i32 = arith.constant 0 : i32
    %c0_i32_0 = arith.constant 0 : i32
    %c0_i32_1 = arith.constant 0 : i32
    return %c0_i32, %c0_i32_0 : i32, i32
  }
  func.func @transform_3(%arg0: i32) -> (i32, i32) {
    %c0_i32 = arith.constant 0 : i32
    %c0_i32_0 = arith.constant 0 : i32
    %c0_i32_1 = arith.constant 0 : i32
    return %c0_i32, %c0_i32_0 : i32, i32
  }
  func.func @transform_4(%arg0: i32) -> (i32, i32) {
    %c0_i32 = arith.constant 0 : i32
    %c0_i32_0 = arith.constant 0 : i32
    return %c0_i32, %arg0 : i32, i32
  }
}

</mosaic_0001>

<llo_original>
// kernel: tpu_custom_call.1
$region0: #{tpu_custom_call.1}
  #allocation0 [shape = 'u32[]', space=smem, size = 0x4, offset = 0x4, fixed_abs, tag = 'smem constant byte address 0x4 - core index']
  #allocation1 [shape = 'u32[144,128]{1,0:T(1,128)}', space=vmem, size = 0x12000, scoped, tag = 'internal scratch']
  #allocation2 [shape = 'f32[1,1]{1,0:T(1,128)S(1)}', space=vmem, size = 0x200, scoped, tag = 'scoped memory for tpu_custom_call.1']
  %s0 = inlined_call_operand.hbm [shape: f32[8,48,128], index: 0, kind: input, shape index: {}]
  %s1 = inlined_call_operand.vmem [shape: f32[48,16], index: 1, kind: input, shape index: {}]
  %s2 = inlined_call_operand.vmem [shape: f32[16,2], index: 2, kind: input, shape index: {}]
  %s3 = inlined_call_operand.<no memory space> [shape: f32[1,1], index: 3, kind: input, shape index: {}]
  %s4 = inlined_call_operand.hbm [shape: f32[1,128], index: 4, kind: output, shape index: {}]
  %s5 = sld [smem:[#allocation0]]
  $region30: #{tpu_custom_call.1} parent=0
    _
  %s7 = ssub.s32 1, %s5
  %s8 = scalar_select 0, %s7, %s5
  %v9 = vstv %s3
  %10 = vst [vmem:[#allocation2] sm:$0x1] %v9
  $region1: #{tpu_custom_call.1} parent=0
    #allocation3 [shape = 'u8[196608]{0}', space=vmem, size = 0x30000, scoped, tag = 'input window, operand 0, single buffered']
    #allocation4 [shape = 's32[1]{0}', space=sflag, size = 0x4, scoped, tag = 'scoped memory for tpu_custom_call.1']
    #allocation5 [shape = 's32[1]{0}', space=sflag, size = 0x4, scoped, tag = 'scoped memory for tpu_custom_call.1']
    #allocation6 [shape = 'u8[512]{0}', space=vmem, size = 0x400, scoped, tag = 'output window, operand 0, single buffered']
    %11 = vsyncpa [#allocation4], 0
    %12 = vsyncpa [#allocation5], 0
    // Predicated region
    $region2: #{tpu_custom_call.1} parent=1 // pred_check
      _
    $region3: #{tpu_custom_call.1} parent=1 // pred_check_branch
      %14 = sbr.rel (0) target = $region5
    $region4: #{tpu_custom_call.1} parent=1 // pred_region
      %s16 = ssub.s32 6144, 6144
      %17 = vsyncadd [#allocation4], %s16
      %s18 = sshll.u32 [#allocation3], 4
      %s19 = int_to_ptr.vmem [resolvable:$true] %s18
      %24 = dma.hbm_to_vmem [thread:$0]  %s0, 6144, %s19, [#allocation4], 128, 128, 8
    $region5: #{tpu_custom_call.1} parent=1 // pred_fallthru
      _
    // Predicated region
    $region6: #{tpu_custom_call.1} parent=1 // pred_check
      _
    $region7: #{tpu_custom_call.1} parent=1 // pred_check_branch
      %26 = sbr.rel (0) target = $region9
    $region8: #{tpu_custom_call.1} parent=1 // pred_region
      _
    $region9: #{tpu_custom_call.1} parent=1 // pred_fallthru
      _
    // Predicated region
    $region10: #{tpu_custom_call.1} parent=1 // pred_check
      _
    $region11: #{tpu_custom_call.1} parent=1 // pred_check_branch
      %28 = sbr.rel (0) target = $region13
    $region12: #{tpu_custom_call.1} parent=1 // pred_region
      _
    $region13: #{tpu_custom_call.1} parent=1 // pred_fallthru
      _
    // Predicated region
    $region14: #{tpu_custom_call.1} parent=1 // pred_check
      _
    $region15: #{tpu_custom_call.1} parent=1 // pred_check_branch
      %30 = sbr.rel (0) target = $region17
    $region16: #{tpu_custom_call.1} parent=1 // pred_region
      _
    $region17: #{tpu_custom_call.1} parent=1 // pred_fallthru
      _
    // Predicated region
    $region18: #{tpu_custom_call.1} parent=1 // pred_check
      _
    $region19: #{tpu_custom_call.1} parent=1 // pred_check_branch
      %32 = sbr.rel (0) target = $region21
    $region20: #{tpu_custom_call.1} parent=1 // pred_region
      %33 = dma.done [#allocation4], 6144
    $region21: #{tpu_custom_call.1} parent=1 // pred_fallthru
      _
    %v34 = vld [vmem:[%s1] sm:$0xff]
    %v35 = vld [vmem:[%s1 + $0x8] sm:$0xff]
    %v36 = vld [vmem:[%s1 + $0x10] sm:$0xff]
    %v37 = vld [vmem:[%s1 + $0x18] sm:$0xff]
    %v38 = vld [vmem:[%s1 + $0x20] sm:$0xff]
    %v39 = vld [vmem:[%s1 + $0x28] sm:$0xff]
    %v40 = vld [vmem:[%s2] sm:$0xff]
    %v41 = vld [vmem:[%s2 + $0x8] sm:$0xff]
    %43 = vset.pattern.permute.xlu0 0
    %44 = vperm.xlu0 %43, %v40
    %v45 = vpop.permute.xlu0 %44
    %48 = vset.pattern.permute.xlu0 0
    %49 = vperm.xlu0 %48, %v41
    %v50 = vpop.permute.xlu0 %49
    %v52 = vld [vmem:[#allocation3] sm:$0xff]
    %v53 = vld [vmem:[#allocation3 + $0x8] sm:$0xff]
    %v54 = vld [vmem:[#allocation3 + $0x10] sm:$0xff]
    %v55 = vld [vmem:[#allocation3 + $0x18] sm:$0xff]
    %v56 = vld [vmem:[#allocation3 + $0x20] sm:$0xff]
    %v57 = vld [vmem:[#allocation3 + $0x28] sm:$0xff]
    %vm58 = vcmask 130048
    %v60 = vsel %vm58, %v34, 0
    %v63 = vsel %vm58, %v35, 0
    %v66 = vsel %vm58, %v36, 0
    %v69 = vsel %vm58, %v37, 0
    %v72 = vsel %vm58, %v38, 0
    %v75 = vsel %vm58, %v39, 0
    %77 = vmatprep.subr.mxu0 0.0
    %78 = vmatpush1.msra.mxu0 0.0
    %79 = vmatprep.subr.mxu0 0.0
    %80 = vmatpush1.msra.mxu0 0.0
    %81 = vmatprep.subr.mxu0 0.0
    %82 = vmatpush1.msra.mxu0 0.0
    %83 = vmatprep.subr.mxu0 0.0
    %84 = vmatpush1.msra.mxu0 0.0
    %85 = vmatprep.subr.mxu0 0.0
    %86 = vmatpush1.msra.mxu0 0.0
    %87 = vmatprep.subr.mxu0 0.0
    %88 = vmatpush1.msra.mxu0 0.0
    %89 = vmatprep.subr.mxu0 0.0
    %90 = vmatpush1.msra.mxu0 0.0
    %91 = vmatprep.subr.mxu0 0.0
    %92 = vmatpush1.msra.mxu0 0.0
    %93 = vmatprep.subr.mxu0 0.0
    %94 = vmatpush1.msra.mxu0 0.0
    %95 = vmatprep.subr.mxu0 0.0
    %96 = vmatpush1.msra.mxu0 0.0
    %97 = vmatprep.subr.mxu0 0.0
    %98 = vmatpush1.msra.mxu0 0.0
    %99 = vmatprep.subr.mxu0 0.0
    %100 = vmatpush1.msra.mxu0 0.0
    %101 = vmatprep.subr.mxu0 0.0
    %102 = vmatpush1.msra.mxu0 0.0
    %103 = vmatprep.subr.mxu0 0.0
    %104 = vmatpush1.msra.mxu0 0.0
    %105 = vmatprep.subr.mxu0 0.0
    %106 = vmatpush1.msra.mxu0 0.0
    %107 = vmatprep.subr.mxu0 0.0
    %108 = vmatpush1.msra.mxu0 0.0
    %109 = vmatprep.subr.mxu0 0.0
    %110 = vmatpush1.msra.mxu0 0.0
    %111 = vmatprep.subr.mxu0 0.0
    %112 = vmatpush1.msra.mxu0 0.0
    %113 = vmatprep.subr.mxu0 0.0
    %114 = vmatpush1.msra.mxu0 0.0
    %115 = vmatprep.subr.mxu0 0.0
    %116 = vmatpush1.msra.mxu0 0.0
    %117 = vmatprep.subr.mxu0 0.0
    %118 = vmatpush1.msra.mxu0 0.0
    %119 = vmatprep.subr.mxu0 0.0
    %120 = vmatpush1.msra.mxu0 0.0
    %121 = vmatprep.subr.mxu0 0.0
    %122 = vmatpush1.msra.mxu0 0.0
    %123 = vmatprep.subr.mxu0 0.0
    %124 = vmatpush1.msra.mxu0 0.0
    %125 = vmatprep.subr.mxu0 0.0
    %126 = vmatpush1.msra.mxu0 0.0
    %127 = vmatprep.subr.mxu0 0.0
    %128 = vmatpush1.msra.mxu0 0.0
    %129 = vmatprep.subr.mxu0 0.0
    %130 = vmatpush1.msra.mxu0 0.0
    %131 = vmatprep.subr.mxu0 0.0
    %132 = vmatpush1.msra.mxu0 0.0
    %133 = vmatprep.subr.mxu0 0.0
    %134 = vmatpush1.msra.mxu0 0.0
    %135 = vmatprep.subr.mxu0 0.0
    %136 = vmatpush1.msra.mxu0 0.0
    %137 = vmatprep.subr.mxu0 0.0
    %138 = vmatpush1.msra.mxu0 0.0
    %139 = vmatprep.subr.mxu0 0.0
    %140 = vmatpush1.msra.mxu0 0.0
    %141 = vmatprep.mubr.f32.mxu0 0.0
    %142 = vmatmul.mubr.f32.gmra.mrb[0].mxu0 %v60
    %v143 = vpop.f32.mrb[0].mxu0
    %v144 = vadd.f32 0.0, %v143
    %v145 = vpop.f32.mrb[0].mxu0
    %146 = vmatprep.mubr.f32.mxu0 0.0
    %147 = vmatmul.mubr.f32.gmra.mrb[0].mxu0 %v63
    %v148 = vpop.f32.mrb[0].mxu0
    %v149 = vadd.f32 0.0, %v148
    %v150 = vpop.f32.mrb[0].mxu0
    %151 = vmatprep.mubr.f32.mxu0 0.0
    %152 = vmatmul.mubr.f32.gmra.mrb[0].mxu0 %v66
    %v153 = vpop.f32.mrb[0].mxu0
    %v154 = vadd.f32 0.0, %v153
    %v155 = vpop.f32.mrb[0].mxu0
    %156 = vmatprep.mubr.f32.mxu0 0.0
    %157 = vmatmul.mubr.f32.gmra.mrb[0].mxu0 %v69
    %v158 = vpop.f32.mrb[0].mxu0
    %v159 = vadd.f32 0.0, %v158
    %v160 = vpop.f32.mrb[0].mxu0
    %161 = vmatprep.mubr.f32.mxu0 0.0
    %162 = vmatmul.mubr.f32.gmra.mrb[0].mxu0 %v72
    %v163 = vpop.f32.mrb[0].mxu0
    %v164 = vadd.f32 0.0, %v163
    %v165 = vpop.f32.mrb[0].mxu0
    %166 = vmatprep.mubr.f32.mxu0 0.0
    %167 = vmatmul.mubr.f32.gmra.mrb[0].mxu0 %v75
    %v168 = vpop.f32.mrb[0].mxu0
    %v169 = vadd.f32 0.0, %v168
    %v170 = vpop.f32.mrb[0].mxu0
    %171 = vdwg.mxu0
    %v172 = vadd.f32 %v52, %v144
    %v173 = vadd.f32 %v53, %v149
    %v174 = vadd.f32 %v54, %v154
    %v175 = vadd.f32 %v55, %v159
    %v176 = vxor.u32 %v172, 2147483648
    %v177 = vxor.u32 %v173, 2147483648
    %v178 = vxor.u32 %v174, 2147483648
    %v179 = vxor.u32 %v175, 2147483648
    %v180 = vmul.f32 %v176, 1.442695
    %v181 = vpow.pop %v180
    %v182 = vmul.f32 %v177, 1.442695
    %v183 = vpow.pop %v182
    %v184 = vmul.f32 %v178, 1.442695
    %v185 = vpow.pop %v184
    %v186 = vmul.f32 %v179, 1.442695
    %v187 = vpow.pop %v186
    %v188 = vadd.f32 %v181, 1.0
    %v189 = vadd.f32 %v183, 1.0
    %v190 = vadd.f32 %v185, 1.0
    %v191 = vadd.f32 %v187, 1.0
    %v192 = vrcp.pop %v188
    %v193 = vmul.f32 1.0, %v192
    %v194 = vrcp.pop %v189
    %v195 = vmul.f32 1.0, %v194
    %v196 = vrcp.pop %v190
    %v197 = vmul.f32 1.0, %v196
    %v198 = vrcp.pop %v191
    %v199 = vmul.f32 1.0, %v198
    %v200 = vadd.f32 %v164, %v45
    %v201 = vadd.f32 %v169, %v50
    %v202 = vmul.f32 %v193, %v200
    %v203 = vmul.f32 %v195, %v201
    %v204 = vadd.f32 %v56, %v202
    %v205 = vadd.f32 %v57, %v203
    %v206 = vtanh.pop %v204
    %v207 = vtanh.pop %v205
    %v208 = vsub.f32 1.0, %v197
    %v209 = vsub.f32 1.0, %v199
    %v210 = vmul.f32 %v208, %v206
    %v211 = vmul.f32 %v209, %v207
    %v212 = vmul.f32 %v197, 0.0
    %v213 = vmul.f32 %v199, 0.0
    %v214 = vadd.f32 %v210, %v212
    %v215 = vadd.f32 %v211, %v213
    %s216 = scalar_lea.vmem [#allocation3], 48
    %v217 = vld [vmem:[%s216] sm:$0xff]
    %v218 = vld [vmem:[%s216 + $0x8] sm:$0xff]
    %v219 = vld [vmem:[%s216 + $0x10] sm:$0xff]
    %v220 = vld [vmem:[%s216 + $0x18] sm:$0xff]
    %v221 = vld [vmem:[%s216 + $0x20] sm:$0xff]
    %v222 = vld [vmem:[%s216 + $0x28] sm:$0xff]
    %223 = vmatprep.subr.mxu0 0.0
    %224 = vmatpush1.msra.mxu0 %v214
    %225 = vmatprep.subr.mxu0 0.0
    %226 = vmatpush1.msra.mxu0 %v215
    %227 = vmatprep.subr.mxu0 0.0
    %228 = vmatpush1.msra.mxu0 0.0
    %229 = vmatprep.subr.mxu0 0.0
    %230 = vmatpush1.msra.mxu0 0.0
    %231 = vmatprep.subr.mxu0 0.0
    %232 = vmatpush1.msra.mxu0 0.0
    %233 = vmatprep.subr.mxu0 0.0
    %234 = vmatpush1.msra.mxu0 0.0
    %235 = vmatprep.subr.mxu0 0.0
    %236 = vmatpush1.msra.mxu0 0.0
    %237 = vmatprep.subr.mxu0 0.0
    %238 = vmatpush1.msra.mxu0 0.0
    %239 = vmatprep.subr.mxu0 0.0
    %240 = vmatpush1.msra.mxu0 0.0
    %241 = vmatprep.subr.mxu0 0.0
    %242 = vmatpush1.msra.mxu0 0.0
    %243 = vmatprep.subr.mxu0 0.0
    %244 = vmatpush1.msra.mxu0 0.0
    %245 = vmatprep.subr.mxu0 0.0
    %246 = vmatpush1.msra.mxu0 0.0
    %247 = vmatprep.subr.mxu0 0.0
    %248 = vmatpush1.msra.mxu0 0.0
    %249 = vmatprep.subr.mxu0 0.0
    %250 = vmatpush1.msra.mxu0 0.0
    %251 = vmatprep.subr.mxu0 0.0
    %252 = vmatpush1.msra.mxu0 0.0
    %253 = vmatprep.subr.mxu0 0.0
    %254 = vmatpush1.msra.mxu0 0.0
    %255 = vmatprep.subr.mxu0 0.0
    %256 = vmatpush1.msra.mxu0 0.0
    %257 = vmatprep.subr.mxu0 0.0
    %258 = vmatpush1.msra.mxu0 0.0
    %259 = vmatprep.subr.mxu0 0.0
    %260 = vmatpush1.msra.mxu0 0.0
    %261 = vmatprep.subr.mxu0 0.0
    %262 = vmatpush1.msra.mxu0 0.0
    %263 = vmatprep.subr.mxu0 0.0
    %264 = vmatpush1.msra.mxu0 0.0
    %265 = vmatprep.subr.mxu0 0.0
    %266 = vmatpush1.msra.mxu0 0.0
    %267 = vmatprep.subr.mxu0 0.0
    %268 = vmatpush1.msra.mxu0 0.0
    %269 = vmatprep.subr.mxu0 0.0
    %270 = vmatpush1.msra.mxu0 0.0
    %271 = vmatprep.subr.mxu0 0.0
    %272 = vmatpush1.msra.mxu0 0.0
    %273 = vmatprep.subr.mxu0 0.0
    %274 = vmatpush1.msra.mxu0 0.0
    %275 = vmatprep.subr.mxu0 0.0
    %276 = vmatpush1.msra.mxu0 0.0
    %277 = vmatprep.subr.mxu0 0.0
    %278 = vmatpush1.msra.mxu0 0.0
    %279 = vmatprep.subr.mxu0 0.0
    %280 = vmatpush1.msra.mxu0 0.0
    %281 = vmatprep.subr.mxu0 0.0
    %282 = vmatpush1.msra.mxu0 0.0
    %283 = vmatprep.subr.mxu0 0.0
    %284 = vmatpush1.msra.mxu0 0.0
    %285 = vmatprep.subr.mxu0 0.0
    %286 = vmatpush1.msra.mxu0 0.0
    %287 = vmatprep.mubr.f32.mxu0 0.0
    %288 = vmatmul.mubr.f32.gmra.mrb[0].mxu0 %v60
    %v289 = vpop.f32.mrb[0].mxu0
    %v290 = vadd.f32 0.0, %v289
    %v291 = vpop.f32.mrb[0].mxu0
    %292 = vmatprep.mubr.f32.mxu0 0.0
    %293 = vmatmul.mubr.f32.gmra.mrb[0].mxu0 %v63
    %v294 = vpop.f32.mrb[0].mxu0
    %v295 = vadd.f32 0.0, %v294
    %v296 = vpop.f32.mrb[0].mxu0
    %297 = vmatprep.mubr.f32.mxu0 0.0
    %298 = vmatmul.mubr.f32.gmra.mrb[0].mxu0 %v66
    %v299 = vpop.f32.mrb[0].mxu0
    %v300 = vadd.f32 0.0, %v299
    %v301 = vpop.f32.mrb[0].mxu0
    %302 = vmatprep.mubr.f32.mxu0 0.0
    %303 = vmatmul.mubr.f32.gmra.mrb[0].mxu0 %v69
    %v304 = vpop.f32.mrb[0].mxu0
    %v305 = vadd.f32 0.0, %v304
    %v306 = vpop.f32.mrb[0].mxu0
    %307 = vmatprep.mubr.f32.mxu0 0.0
    %308 = vmatmul.mubr.f32.gmra.mrb[0].mxu0 %v72
    %v309 = vpop.f32.mrb[0].mxu0
    %v310 = vadd.f32 0.0, %v309
    %v311 = vpop.f32.mrb[0].mxu0
    %312 = vmatprep.mubr.f32.mxu0 0.0
    %313 = vmatmul.mubr.f32.gmra.mrb[0].mxu0 %v75
    %v314 = vpop.f32.mrb[0].mxu0
    %v315 = vadd.f32 0.0, %v314
    %v316 = vpop.f32.mrb[0].mxu0
    %317 = vdwg.mxu0
    %v318 = vadd.f32 %v217, %v290
    %v319 = vadd.f32 %v218, %v295
    %v320 = vadd.f32 %v219, %v300
    %v321 = vadd.f32 %v220, %v305
    %v322 = vxor.u32 %v318, 2147483648
    %v323 = vxor.u32 %v319, 2147483648
    %v324 = vxor.u32 %v320, 2147483648
    %v325 = vxor.u32 %v321, 2147483648
    %v326 = vmul.f32 %v322, 1.442695
    %v327 = vpow.pop %v326
    %v328 = vmul.f32 %v323, 1.442695
    %v329 = vpow.pop %v328
    %v330 = vmul.f32 %v324, 1.442695
    %v331 = vpow.pop %v330
    %v332 = vmul.f32 %v325, 1.442695
    %v333 = vpow.pop %v332
    %v334 = vadd.f32 %v327, 1.0
    %v335 = vadd.f32 %v329, 1.0
    %v336 = vadd.f32 %v331, 1.0
    %v337 = vadd.f32 %v333, 1.0
    %v338 = vrcp.pop %v334
    %v339 = vmul.f32 1.0, %v338
    %v340 = vrcp.pop %v335
    %v341 = vmul.f32 1.0, %v340
    %v342 = vrcp.pop %v336
    %v343 = vmul.f32 1.0, %v342
    %v344 = vrcp.pop %v337
    %v345 = vmul.f32 1.0, %v344
    %v346 = vadd.f32 %v310, %v45
    %v347 = vadd.f32 %v315, %v50
    %v348 = vmul.f32 %v339, %v346
    %v349 = vmul.f32 %v341, %v347
    %v350 = vadd.f32 %v221, %v348
    %v351 = vadd.f32 %v222, %v349
    %v352 = vtanh.pop %v350
    %v353 = vtanh.pop %v351
    %v354 = vsub.f32 1.0, %v343
    %v355 = vsub.f32 1.0, %v345
    %v356 = vmul.f32 %v354, %v352
    %v357 = vmul.f32 %v355, %v353
    %v358 = vmul.f32 %v343, %v214
    %v359 = vmul.f32 %v345, %v215
    %v360 = vadd.f32 %v356, %v358
    %v361 = vadd.f32 %v357, %v359
    %s362 = scalar_lea.vmem [#allocation3], 96
    %v363 = vld [vmem:[%s362] sm:$0xff]
    %v364 = vld [vmem:[%s362 + $0x8] sm:$0xff]
    %v365 = vld [vmem:[%s362 + $0x10] sm:$0xff]
    %v366 = vld [vmem:[%s362 + $0x18] sm:$0xff]
    %v367 = vld [vmem:[%s362 + $0x20] sm:$0xff]
    %v368 = vld [vmem:[%s362 + $0x28] sm:$0xff]
    %369 = vmatprep.subr.mxu0 0.0
    %370 = vmatpush1.msra.mxu0 %v360
    %371 = vmatprep.subr.mxu0 0.0
    %372 = vmatpush1.msra.mxu0 %v361
    %373 = vmatprep.subr.mxu0 0.0
    %374 = vmatpush1.msra.mxu0 0.0
    %375 = vmatprep.subr.mxu0 0.0
    %376 = vmatpush1.msra.mxu0 0.0
    %377 = vmatprep.subr.mxu0 0.0
    %378 = vmatpush1.msra.mxu0 0.0
    %379 = vmatprep.subr.mxu0 0.0
    %380 = vmatpush1.msra.mxu0 0.0
    %381 = vmatprep.subr.mxu0 0.0
    %382 = vmatpush1.msra.mxu0 0.0
    %383 = vmatprep.subr.mxu0 0.0
    %384 = vmatpush1.msra.mxu0 0.0
    %385 = vmatprep.subr.mxu0 0.0
    %386 = vmatpush1.msra.mxu0 0.0
    %387 = vmatprep.subr.mxu0 0.0
    %388 = vmatpush1.msra.mxu0 0.0
    %389 = vmatprep.subr.mxu0 0.0
    %390 = vmatpush1.msra.mxu0 0.0
    %391 = vmatprep.subr.mxu0 0.0
    %392 = vmatpush1.msra.mxu0 0.0
    %393 = vmatprep.subr.mxu0 0.0
    %394 = vmatpush1.msra.mxu0 0.0
    %395 = vmatprep.subr.mxu0 0.0
    %396 = vmatpush1.msra.mxu0 0.0
    %397 = vmatprep.subr.mxu0 0.0
    %398 = vmatpush1.msra.mxu0 0.0
    %399 = vmatprep.subr.mxu0 0.0
    %400 = vmatpush1.msra.mxu0 0.0
    %401 = vmatprep.subr.mxu0 0.0
    %402 = vmatpush1.msra.mxu0 0.0
    %403 = vmatprep.subr.mxu0 0.0
    %404 = vmatpush1.msra.mxu0 0.0
    %405 = vmatprep.subr.mxu0 0.0
    %406 = vmatpush1.msra.mxu0 0.0
    %407 = vmatprep.subr.mxu0 0.0
    %408 = vmatpush1.msra.mxu0 0.0
    %409 = vmatprep.subr.mxu0 0.0
    %410 = vmatpush1.msra.mxu0 0.0
    %411 = vmatprep.subr.mxu0 0.0
    %412 = vmatpush1.msra.mxu0 0.0
    %413 = vmatprep.subr.mxu0 0.0
    %414 = vmatpush1.msra.mxu0 0.0
    %415 = vmatprep.subr.mxu0 0.0
    %416 = vmatpush1.msra.mxu0 0.0
    %417 = vmatprep.subr.mxu0 0.0
    %418 = vmatpush1.msra.mxu0 0.0
    %419 = vmatprep.subr.mxu0 0.0
    %420 = vmatpush1.msra.mxu0 0.0
    %421 = vmatprep.subr.mxu0 0.0
    %422 = vmatpush1.msra.mxu0 0.0
    %423 = vmatprep.subr.mxu0 0.0
    %424 = vmatpush1.msra.mxu0 0.0
    %425 = vmatprep.subr.mxu0 0.0
    %426 = vmatpush1.msra.mxu0 0.0
    %427 = vmatprep.subr.mxu0 0.0
    %428 = vmatpush1.msra.mxu0 0.0
    %429 = vmatprep.subr.mxu0 0.0
    %430 = vmatpush1.msra.mxu0 0.0
    %431 = vmatprep.subr.mxu0 0.0
    %432 = vmatpush1.msra.mxu0 0.0
    %433 = vmatprep.mubr.f32.mxu0 0.0
    %434 = vmatmul.mubr.f32.gmra.mrb[0].mxu0 %v60
    %v435 = vpop.f32.mrb[0].mxu0
    %v436 = vadd.f32 0.0, %v435
    %v437 = vpop.f32.mrb[0].mxu0
    %438 = vmatprep.mubr.f32.mxu0 0.0
    %439 = vmatmul.mubr.f32.gmra.mrb[0].mxu0 %v63
    %v440 = vpop.f32.mrb[0].mxu0
    %v441 = vadd.f32 0.0, %v440
    %v442 = vpop.f32.mrb[0].mxu0
    %443 = vmatprep.mubr.f32.mxu0 0.0
    %444 = vmatmul.mubr.f32.gmra.mrb[0].mxu0 %v66
    %v445 = vpop.f32.mrb[0].mxu0
    %v446 = vadd.f32 0.0, %v445
    %v447 = vpop.f32.mrb[0].mxu0
    %448 = vmatprep.mubr.f32.mxu0 0.0
    %449 = vmatmul.mubr.f32.gmra.mrb[0].mxu0 %v69
    %v450 = vpop.f32.mrb[0].mxu0
    %v451 = vadd.f32 0.0, %v450
    %v452 = vpop.f32.mrb[0].mxu0
    %453 = vmatprep.mubr.f32.mxu0 0.0
    %454 = vmatmul.mubr.f32.gmra.mrb[0].mxu0 %v72
    %v455 = vpop.f32.mrb[0].mxu0
    %v456 = vadd.f32 0.0, %v455
    %v457 = vpop.f32.mrb[0].mxu0
    %458 = vmatprep.mubr.f32.mxu0 0.0
    %459 = vmatmul.mubr.f32.gmra.mrb[0].mxu0 %v75
    %v460 = vpop.f32.mrb[0].mxu0
    %v461 = vadd.f32 0.0, %v460
    %v462 = vpop.f32.mrb[0].mxu0
    %463 = vdwg.mxu0
    %v464 = vadd.f32 %v363, %v436
    %v465 = vadd.f32 %v364, %v441
    %v466 = vadd.f32 %v365, %v446
    %v467 = vadd.f32 %v366, %v451
    %v468 = vxor.u32 %v464, 2147483648
    %v469 = vxor.u32 %v465, 2147483648
    %v470 = vxor.u32 %v466, 2147483648
    %v471 = vxor.u32 %v467, 2147483648
    %v472 = vmul.f32 %v468, 1.442695
    %v473 = vpow.pop %v472
    %v474 = vmul.f32 %v469, 1.442695
    %v475 = vpow.pop %v474
    %v476 = vmul.f32 %v470, 1.442695
    %v477 = vpow.pop %v476
    %v478 = vmul.f32 %v471, 1.442695
    %v479 = vpow.pop %v478
    %v480 = vadd.f32 %v473, 1.0
    %v481 = vadd.f32 %v475, 1.0
    %v482 = vadd.f32 %v477, 1.0
    %v483 = vadd.f32 %v479, 1.0
    %v484 = vrcp.pop %v480
    %v485 = vmul.f32 1.0, %v484
    %v486 = vrcp.pop %v481
    %v487 = vmul.f32 1.0, %v486
    %v488 = vrcp.pop %v482
    %v489 = vmul.f32 1.0, %v488
    %v490 = vrcp.pop %v483
    %v491 = vmul.f32 1.0, %v490
    %v492 = vadd.f32 %v456, %v45
    %v493 = vadd.f32 %v461, %v50
    %v494 = vmul.f32 %v485, %v492
    %v495 = vmul.f32 %v487, %v493
    %v496 = vadd.f32 %v367, %v494
    %v497 = vadd.f32 %v368, %v495
    %v498 = vtanh.pop %v496
    %v499 = vtanh.pop %v497
    %v500 = vsub.f32 1.0, %v489
    %v501 = vsub.f32 1.0, %v491
    %v502 = vmul.f32 %v500, %v498
    %v503 = vmul.f32 %v501, %v499
    %v504 = vmul.f32 %v489, %v360
    %v505 = vmul.f32 %v491, %v361
    %v506 = vadd.f32 %v502, %v504
    %v507 = vadd.f32 %v503, %v505
    %s508 = scalar_lea.vmem [#allocation3], 144
    %v509 = vld [vmem:[%s508] sm:$0xff]
    %v510 = vld [vmem:[%s508 + $0x8] sm:$0xff]
    %v511 = vld [vmem:[%s508 + $0x10] sm:$0xff]
    %v512 = vld [vmem:[%s508 + $0x18] sm:$0xff]
    %v513 = vld [vmem:[%s508 + $0x20] sm:$0xff]
    %v514 = vld [vmem:[%s508 + $0x28] sm:$0xff]
    %515 = vmatprep.subr.mxu0 0.0
    %516 = vmatpush1.msra.mxu0 %v506
    %517 = vmatprep.subr.mxu0 0.0
    %518 = vmatpush1.msra.mxu0 %v507
    %519 = vmatprep.subr.mxu0 0.0
    %520 = vmatpush1.msra.mxu0 0.0
    %521 = vmatprep.subr.mxu0 0.0
    %522 = vmatpush1.msra.mxu0 0.0
    %523 = vmatprep.subr.mxu0 0.0
    %524 = vmatpush1.msra.mxu0 0.0
    %525 = vmatprep.subr.mxu0 0.0
    %526 = vmatpush1.msra.mxu0 0.0
    %527 = vmatprep.subr.mxu0 0.0
    %528 = vmatpush1.msra.mxu0 0.0
    %529 = vmatprep.subr.mxu0 0.0
    %530 = vmatpush1.msra.mxu0 0.0
    %531 = vmatprep.subr.mxu0 0.0
    %532 = vmatpush1.msra.mxu0 0.0
    %533 = vmatprep.subr.mxu0 0.0
    %534 = vmatpush1.msra.mxu0 0.0
    %535 = vmatprep.subr.mxu0 0.0
    %536 = vmatpush1.msra.mxu0 0.0
    %537 = vmatprep.subr.mxu0 0.0
    %538 = vmatpush1.msra.mxu0 0.0
    %539 = vmatprep.subr.mxu0 0.0
    %540 = vmatpush1.msra.mxu0 0.0
    %541 = vmatprep.subr.mxu0 0.0
    %542 = vmatpush1.msra.mxu0 0.0
    %543 = vmatprep.subr.mxu0 0.0
    %544 = vmatpush1.msra.mxu0 0.0
    %545 = vmatprep.subr.mxu0 0.0
    %546 = vmatpush1.msra.mxu0 0.0
    %547 = vmatprep.subr.mxu0 0.0
    %548 = vmatpush1.msra.mxu0 0.0
    %549 = vmatprep.subr.mxu0 0.0
    %550 = vmatpush1.msra.mxu0 0.0
    %551 = vmatprep.subr.mxu0 0.0
    %552 = vmatpush1.msra.mxu0 0.0
    %553 = vmatprep.subr.mxu0 0.0
    %554 = vmatpush1.msra.mxu0 0.0
    %555 = vmatprep.subr.mxu0 0.0
    %556 = vmatpush1.msra.mxu0 0.0
    %557 = vmatprep.subr.mxu0 0.0
    %558 = vmatpush1.msra.mxu0 0.0
    %559 = vmatprep.subr.mxu0 0.0
    %560 = vmatpush1.msra.mxu0 0.0
    %561 = vmatprep.subr.mxu0 0.0
    %562 = vmatpush1.msra.mxu0 0.0
    %563 = vmatprep.subr.mxu0 0.0
    %564 = vmatpush1.msra.mxu0 0.0
    %565 = vmatprep.subr.mxu0 0.0
    %566 = vmatpush1.msra.mxu0 0.0
    %567 = vmatprep.subr.mxu0 0.0
    %568 = vmatpush1.msra.mxu0 0.0
    %569 = vmatprep.subr.mxu0 0.0
    %570 = vmatpush1.msra.mxu0 0.0
    %571 = vmatprep.subr.mxu0 0.0
    %572 = vmatpush1.msra.mxu0 0.0
    %573 = vmatprep.subr.mxu0 0.0
    %574 = vmatpush1.msra.mxu0 0.0
    %575 = vmatprep.subr.mxu0 0.0
    %576 = vmatpush1.msra.mxu0 0.0
    %577 = vmatprep.subr.mxu0 0.0
    %578 = vmatpush1.msra.mxu0 0.0
    %579 = vmatprep.mubr.f32.mxu0 0.0
    %580 = vmatmul.mubr.f32.gmra.mrb[0].mxu0 %v60
    %v581 = vpop.f32.mrb[0].mxu0
    %v582 = vadd.f32 0.0, %v581
    %v583 = vpop.f32.mrb[0].mxu0
    %584 = vmatprep.mubr.f32.mxu0 0.0
    %585 = vmatmul.mubr.f32.gmra.mrb[0].mxu0 %v63
    %v586 = vpop.f32.mrb[0].mxu0
    %v587 = vadd.f32 0.0, %v586
    %v588 = vpop.f32.mrb[0].mxu0
    %589 = vmatprep.mubr.f32.mxu0 0.0
    %590 = vmatmul.mubr.f32.gmra.mrb[0].mxu0 %v66
    %v591 = vpop.f32.mrb[0].mxu0
    %v592 = vadd.f32 0.0, %v591
    %v593 = vpop.f32.mrb[0].mxu0
    %594 = vmatprep.mubr.f32.mxu0 0.0
    %595 = vmatmul.mubr.f32.gmra.mrb[0].mxu0 %v69
    %v596 = vpop.f32.mrb[0].mxu0
    %v597 = vadd.f32 0.0, %v596
    %v598 = vpop.f32.mrb[0].mxu0
    %599 = vmatprep.mubr.f32.mxu0 0.0
    %600 = vmatmul.mubr.f32.gmra.mrb[0].mxu0 %v72
    %v601 = vpop.f32.mrb[0].mxu0
    %v602 = vadd.f32 0.0, %v601
    %v603 = vpop.f32.mrb[0].mxu0
    %604 = vmatprep.mubr.f32.mxu0 0.0
    %605 = vmatmul.mubr.f32.gmra.mrb[0].mxu0 %v75
    %v606 = vpop.f32.mrb[0].mxu0
    %v607 = vadd.f32 0.0, %v606
    %v608 = vpop.f32.mrb[0].mxu0
    %609 = vdwg.mxu0
    %v610 = vadd.f32 %v509, %v582
    %v611 = vadd.f32 %v510, %v587
    %v612 = vadd.f32 %v511, %v592
    %v613 = vadd.f32 %v512, %v597
    %v614 = vxor.u32 %v610, 2147483648
    %v615 = vxor.u32 %v611, 2147483648
    %v616 = vxor.u32 %v612, 2147483648
    %v617 = vxor.u32 %v613, 2147483648
    %v618 = vmul.f32 %v614, 1.442695
    %v619 = vpow.pop %v618
    %v620 = vmul.f32 %v615, 1.442695
    %v621 = vpow.pop %v620
    %v622 = vmul.f32 %v616, 1.442695
    %v623 = vpow.pop %v622
    %v624 = vmul.f32 %v617, 1.442695
    %v625 = vpow.pop %v624
    %v626 = vadd.f32 %v619, 1.0
    %v627 = vadd.f32 %v621, 1.0
    %v628 = vadd.f32 %v623, 1.0
    %v629 = vadd.f32 %v625, 1.0
    %v630 = vrcp.pop %v626
    %v631 = vmul.f32 1.0, %v630
    %v632 = vrcp.pop %v627
    %v633 = vmul.f32 1.0, %v632
    %v634 = vrcp.pop %v628
    %v635 = vmul.f32 1.0, %v634
    %v636 = vrcp.pop %v629
    %v637 = vmul.f32 1.0, %v636
    %v638 = vadd.f32 %v602, %v45
    %v639 = vadd.f32 %v607, %v50
    %v640 = vmul.f32 %v631, %v638
    %v641 = vmul.f32 %v633, %v639
    %v642 = vadd.f32 %v513, %v640
    %v643 = vadd.f32 %v514, %v641
    %v644 = vtanh.pop %v642
    %v645 = vtanh.pop %v643
    %v646 = vsub.f32 1.0, %v635
    %v647 = vsub.f32 1.0, %v637
    %v648 = vmul.f32 %v646, %v644
    %v649 = vmul.f32 %v647, %v645
    %v650 = vmul.f32 %v635, %v506
    %v651 = vmul.f32 %v637, %v507
    %v652 = vadd.f32 %v648, %v650
    %v653 = vadd.f32 %v649, %v651
    %s654 = scalar_lea.vmem [#allocation3], 192
    %v655 = vld [vmem:[%s654] sm:$0xff]
    %v656 = vld [vmem:[%s654 + $0x8] sm:$0xff]
    %v657 = vld [vmem:[%s654 + $0x10] sm:$0xff]
    %v658 = vld [vmem:[%s654 + $0x18] sm:$0xff]
    %v659 = vld [vmem:[%s654 + $0x20] sm:$0xff]
    %v660 = vld [vmem:[%s654 + $0x28] sm:$0xff]
    %661 = vmatprep.subr.mxu0 0.0
    %662 = vmatpush1.msra.mxu0 %v652
    %663 = vmatprep.subr.mxu0 0.0
    %664 = vmatpush1.msra.mxu0 %v653
    %665 = vmatprep.subr.mxu0 0.0
    %666 = vmatpush1.msra.mxu0 0.0
    %667 = vmatprep.subr.mxu0 0.0
    %668 = vmatpush1.msra.mxu0 0.0
    %669 = vmatprep.subr.mxu0 0.0
    %670 = vmatpush1.msra.mxu0 0.0
    %671 = vmatprep.subr.mxu0 0.0
    %672 = vmatpush1.msra.mxu0 0.0
    %673 = vmatprep.subr.mxu0 0.0
    %674 = vmatpush1.msra.mxu0 0.0
    %675 = vmatprep.subr.mxu0 0.0
    %676 = vmatpush1.msra.mxu0 0.0
    %677 = vmatprep.subr.mxu0 0.0
    %678 = vmatpush1.msra.mxu0 0.0
    %679 = vmatprep.subr.mxu0 0.0
    %680 = vmatpush1.msra.mxu0 0.0
    %681 = vmatprep.subr.mxu0 0.0
    %682 = vmatpush1.msra.mxu0 0.0
    %683 = vmatprep.subr.mxu0 0.0
    %684 = vmatpush1.msra.mxu0 0.0
    %685 = vmatprep.subr.mxu0 0.0
    %686 = vmatpush1.msra.mxu0 0.0
    %687 = vmatprep.subr.mxu0 0.0
    %688 = vmatpush1.msra.mxu0 0.0
    %689 = vmatprep.subr.mxu0 0.0
    %690 = vmatpush1.msra.mxu0 0.0
    %691 = vmatprep.subr.mxu0 0.0
    %692 = vmatpush1.msra.mxu0 0.0
    %693 = vmatprep.subr.mxu0 0.0
    %694 = vmatpush1.msra.mxu0 0.0
    %695 = vmatprep.subr.mxu0 0.0
    %696 = vmatpush1.msra.mxu0 0.0
    %697 = vmatprep.subr.mxu0 0.0
    %698 = vmatpush1.msra.mxu0 0.0
    %699 = vmatprep.subr.mxu0 0.0
    %700 = vmatpush1.msra.mxu0 0.0
    %701 = vmatprep.subr.mxu0 0.0
    %702 = vmatpush1.msra.mxu0 0.0
    %703 = vmatprep.subr.mxu0 0.0
    %704 = vmatpush1.msra.mxu0 0.0
    %705 = vmatprep.subr.mxu0 0.0
    %706 = vmatpush1.msra.mxu0 0.0
    %707 = vmatprep.subr.mxu0 0.0
    %708 = vmatpush1.msra.mxu0 0.0
    %709 = vmatprep.subr.mxu0 0.0
    %710 = vmatpush1.msra.mxu0 0.0
    %711 = vmatprep.subr.mxu0 0.0
    %712 = vmatpush1.msra.mxu0 0.0
    %713 = vmatprep.subr.mxu0 0.0
    %714 = vmatpush1.msra.mxu0 0.0
    %715 = vmatprep.subr.mxu0 0.0
    %716 = vmatpush1.msra.mxu0 0.0
    %717 = vmatprep.subr.mxu0 0.0
    %718 = vmatpush1.msra.mxu0 0.0
    %719 = vmatprep.subr.mxu0 0.0
    %720 = vmatpush1.msra.mxu0 0.0
    %721 = vmatprep.subr.mxu0 0.0
    %722 = vmatpush1.msra.mxu0 0.0
    %723 = vmatprep.subr.mxu0 0.0
    %724 = vmatpush1.msra.mxu0 0.0
    %725 = vmatprep.mubr.f32.mxu0 0.0
    %726 = vmatmul.mubr.f32.gmra.mrb[0].mxu0 %v60
    %v727 = vpop.f32.mrb[0].mxu0
    %v728 = vadd.f32 0.0, %v727
    %v729 = vpop.f32.mrb[0].mxu0
    %730 = vmatprep.mubr.f32.mxu0 0.0
    %731 = vmatmul.mubr.f32.gmra.mrb[0].mxu0 %v63
    %v732 = vpop.f32.mrb[0].mxu0
    %v733 = vadd.f32 0.0, %v732
    %v734 = vpop.f32.mrb[0].mxu0
    %735 = vmatprep.mubr.f32.mxu0 0.0
    %736 = vmatmul.mubr.f32.gmra.mrb[0].mxu0 %v66
    %v737 = vpop.f32.mrb[0].mxu0
    %v738 = vadd.f32 0.0, %v737
    %v739 = vpop.f32.mrb[0].mxu0
    %740 = vmatprep.mubr.f32.mxu0 0.0
    %741 = vmatmul.mubr.f32.gmra.mrb[0].mxu0 %v69
    %v742 = vpop.f32.mrb[0].mxu0
    %v743 = vadd.f32 0.0, %v742
    %v744 = vpop.f32.mrb[0].mxu0
    %745 = vmatprep.mubr.f32.mxu0 0.0
    %746 = vmatmul.mubr.f32.gmra.mrb[0].mxu0 %v72
    %v747 = vpop.f32.mrb[0].mxu0
    %v748 = vadd.f32 0.0, %v747
    %v749 = vpop.f32.mrb[0].mxu0
    %750 = vmatprep.mubr.f32.mxu0 0.0
    %751 = vmatmul.mubr.f32.gmra.mrb[0].mxu0 %v75
    %v752 = vpop.f32.mrb[0].mxu0
    %v753 = vadd.f32 0.0, %v752
    %v754 = vpop.f32.mrb[0].mxu0
    %755 = vdwg.mxu0
    %v756 = vadd.f32 %v655, %v728
    %v757 = vadd.f32 %v656, %v733
    %v758 = vadd.f32 %v657, %v738
    %v759 = vadd.f32 %v658, %v743
    %v760 = vxor.u32 %v756, 2147483648
    %v761 = vxor.u32 %v757, 2147483648
    %v762 = vxor.u32 %v758, 2147483648
    %v763 = vxor.u32 %v759, 2147483648
    %v764 = vmul.f32 %v760, 1.442695
    %v765 = vpow.pop %v764
    %v766 = vmul.f32 %v761, 1.442695
    %v767 = vpow.pop %v766
    %v768 = vmul.f32 %v762, 1.442695
    %v769 = vpow.pop %v768
    %v770 = vmul.f32 %v763, 1.442695
    %v771 = vpow.pop %v770
    %v772 = vadd.f32 %v765, 1.0
    %v773 = vadd.f32 %v767, 1.0
    %v774 = vadd.f32 %v769, 1.0
    %v775 = vadd.f32 %v771, 1.0
    %v776 = vrcp.pop %v772
    %v777 = vmul.f32 1.0, %v776
    %v778 = vrcp.pop %v773
    %v779 = vmul.f32 1.0, %v778
    %v780 = vrcp.pop %v774
    %v781 = vmul.f32 1.0, %v780
    %v782 = vrcp.pop %v775
    %v783 = vmul.f32 1.0, %v782
    %v784 = vadd.f32 %v748, %v45
    %v785 = vadd.f32 %v753, %v50
    %v786 = vmul.f32 %v777, %v784
    %v787 = vmul.f32 %v779, %v785
    %v788 = vadd.f32 %v659, %v786
    %v789 = vadd.f32 %v660, %v787
    %v790 = vtanh.pop %v788
    %v791 = vtanh.pop %v789
    %v792 = vsub.f32 1.0, %v781
    %v793 = vsub.f32 1.0, %v783
    %v794 = vmul.f32 %v792, %v790
    %v795 = vmul.f32 %v793, %v791
    %v796 = vmul.f32 %v781, %v652
    %v797 = vmul.f32 %v783, %v653
    %v798 = vadd.f32 %v794, %v796
    %v799 = vadd.f32 %v795, %v797
    %s800 = scalar_lea.vmem [#allocation3], 240
    %v801 = vld [vmem:[%s800] sm:$0xff]
    %v802 = vld [vmem:[%s800 + $0x8] sm:$0xff]
    %v803 = vld [vmem:[%s800 + $0x10] sm:$0xff]
    %v804 = vld [vmem:[%s800 + $0x18] sm:$0xff]
    %v805 = vld [vmem:[%s800 + $0x20] sm:$0xff]
    %v806 = vld [vmem:[%s800 + $0x28] sm:$0xff]
    %807 = vmatprep.subr.mxu0 0.0
    %808 = vmatpush1.msra.mxu0 %v798
    %809 = vmatprep.subr.mxu0 0.0
    %810 = vmatpush1.msra.mxu0 %v799
    %811 = vmatprep.subr.mxu0 0.0
    %812 = vmatpush1.msra.mxu0 0.0
    %813 = vmatprep.subr.mxu0 0.0
    %814 = vmatpush1.msra.mxu0 0.0
    %815 = vmatprep.subr.mxu0 0.0
    %816 = vmatpush1.msra.mxu0 0.0
    %817 = vmatprep.subr.mxu0 0.0
    %818 = vmatpush1.msra.mxu0 0.0
    %819 = vmatprep.subr.mxu0 0.0
    %820 = vmatpush1.msra.mxu0 0.0
    %821 = vmatprep.subr.mxu0 0.0
    %822 = vmatpush1.msra.mxu0 0.0
    %823 = vmatprep.subr.mxu0 0.0
    %824 = vmatpush1.msra.mxu0 0.0
    %825 = vmatprep.subr.mxu0 0.0
    %826 = vmatpush1.msra.mxu0 0.0
    %827 = vmatprep.subr.mxu0 0.0
    %828 = vmatpush1.msra.mxu0 0.0
    %829 = vmatprep.subr.mxu0 0.0
    %830 = vmatpush1.msra.mxu0 0.0
    %831 = vmatprep.subr.mxu0 0.0
    %832 = vmatpush1.msra.mxu0 0.0
    %833 = vmatprep.subr.mxu0 0.0
    %834 = vmatpush1.msra.mxu0 0.0
    %835 = vmatprep.subr.mxu0 0.0
    %836 = vmatpush1.msra.mxu0 0.0
    %837 = vmatprep.subr.mxu0 0.0
    %838 = vmatpush1.msra.mxu0 0.0
    %839 = vmatprep.subr.mxu0 0.0
    %840 = vmatpush1.msra.mxu0 0.0
    %841 = vmatprep.subr.mxu0 0.0
    %842 = vmatpush1.msra.mxu0 0.0
    %843 = vmatprep.subr.mxu0 0.0
    %844 = vmatpush1.msra.mxu0 0.0
    %845 = vmatprep.subr.mxu0 0.0
    %846 = vmatpush1.msra.mxu0 0.0
    %847 = vmatprep.subr.mxu0 0.0
    %848 = vmatpush1.msra.mxu0 0.0
    %849 = vmatprep.subr.mxu0 0.0
    %850 = vmatpush1.msra.mxu0 0.0
    %851 = vmatprep.subr.mxu0 0.0
    %852 = vmatpush1.msra.mxu0 0.0
    %853 = vmatprep.subr.mxu0 0.0
    %854 = vmatpush1.msra.mxu0 0.0
    %855 = vmatprep.subr.mxu0 0.0
    %856 = vmatpush1.msra.mxu0 0.0
    %857 = vmatprep.subr.mxu0 0.0
    %858 = vmatpush1.msra.mxu0 0.0
    %859 = vmatprep.subr.mxu0 0.0
    %860 = vmatpush1.msra.mxu0 0.0
    %861 = vmatprep.subr.mxu0 0.0
    %862 = vmatpush1.msra.mxu0 0.0
    %863 = vmatprep.subr.mxu0 0.0
    %864 = vmatpush1.msra.mxu0 0.0
    %865 = vmatprep.subr.mxu0 0.0
    %866 = vmatpush1.msra.mxu0 0.0
    %867 = vmatprep.subr.mxu0 0.0
    %868 = vmatpush1.msra.mxu0 0.0
    %869 = vmatprep.subr.mxu0 0.0
    %870 = vmatpush1.msra.mxu0 0.0
    %871 = vmatprep.mubr.f32.mxu0 0.0
    %872 = vmatmul.mubr.f32.gmra.mrb[0].mxu0 %v60
    %v873 = vpop.f32.mrb[0].mxu0
    %v874 = vadd.f32 0.0, %v873
    %v875 = vpop.f32.mrb[0].mxu0
    %876 = vmatprep.mubr.f32.mxu0 0.0
    %877 = vmatmul.mubr.f32.gmra.mrb[0].mxu0 %v63
    %v878 = vpop.f32.mrb[0].mxu0
    %v879 = vadd.f32 0.0, %v878
    %v880 = vpop.f32.mrb[0].mxu0
    %881 = vmatprep.mubr.f32.mxu0 0.0
    %882 = vmatmul.mubr.f32.gmra.mrb[0].mxu0 %v66
    %v883 = vpop.f32.mrb[0].mxu0
    %v884 = vadd.f32 0.0, %v883
    %v885 = vpop.f32.mrb[0].mxu0
    %886 = vmatprep.mubr.f32.mxu0 0.0
    %887 = vmatmul.mubr.f32.gmra.mrb[0].mxu0 %v69
    %v888 = vpop.f32.mrb[0].mxu0
    %v889 = vadd.f32 0.0, %v888
    %v890 = vpop.f32.mrb[0].mxu0
    %891 = vmatprep.mubr.f32.mxu0 0.0
    %892 = vmatmul.mubr.f32.gmra.mrb[0].mxu0 %v72
    %v893 = vpop.f32.mrb[0].mxu0
    %v894 = vadd.f32 0.0, %v893
    %v895 = vpop.f32.mrb[0].mxu0
    %896 = vmatprep.mubr.f32.mxu0 0.0
    %897 = vmatmul.mubr.f32.gmra.mrb[0].mxu0 %v75
    %v898 = vpop.f32.mrb[0].mxu0
    %v899 = vadd.f32 0.0, %v898
    %v900 = vpop.f32.mrb[0].mxu0
    %901 = vdwg.mxu0
    %v902 = vadd.f32 %v801, %v874
    %v903 = vadd.f32 %v802, %v879
    %v904 = vadd.f32 %v803, %v884
    %v905 = vadd.f32 %v804, %v889
    %v906 = vxor.u32 %v902, 2147483648
    %v907 = vxor.u32 %v903, 2147483648
    %v908 = vxor.u32 %v904, 2147483648
    %v909 = vxor.u32 %v905, 2147483648
    %v910 = vmul.f32 %v906, 1.442695
    %v911 = vpow.pop %v910
    %v912 = vmul.f32 %v907, 1.442695
    %v913 = vpow.pop %v912
    %v914 = vmul.f32 %v908, 1.442695
    %v915 = vpow.pop %v914
    %v916 = vmul.f32 %v909, 1.442695
    %v917 = vpow.pop %v916
    %v918 = vadd.f32 %v911, 1.0
    %v919 = vadd.f32 %v913, 1.0
    %v920 = vadd.f32 %v915, 1.0
    %v921 = vadd.f32 %v917, 1.0
    %v922 = vrcp.pop %v918
    %v923 = vmul.f32 1.0, %v922
    %v924 = vrcp.pop %v919
    %v925 = vmul.f32 1.0, %v924
    %v926 = vrcp.pop %v920
    %v927 = vmul.f32 1.0, %v926
    %v928 = vrcp.pop %v921
    %v929 = vmul.f32 1.0, %v928
    %v930 = vadd.f32 %v894, %v45
    %v931 = vadd.f32 %v899, %v50
    %v932 = vmul.f32 %v923, %v930
    %v933 = vmul.f32 %v925, %v931
    %v934 = vadd.f32 %v805, %v932
    %v935 = vadd.f32 %v806, %v933
    %v936 = vtanh.pop %v934
    %v937 = vtanh.pop %v935
    %v938 = vsub.f32 1.0, %v927
    %v939 = vsub.f32 1.0, %v929
    %v940 = vmul.f32 %v938, %v936
    %v941 = vmul.f32 %v939, %v937
    %v942 = vmul.f32 %v927, %v798
    %v943 = vmul.f32 %v929, %v799
    %v944 = vadd.f32 %v940, %v942
    %v945 = vadd.f32 %v941, %v943
    %s946 = scalar_lea.vmem [#allocation3], 288
    %v947 = vld [vmem:[%s946] sm:$0xff]
    %v948 = vld [vmem:[%s946 + $0x8] sm:$0xff]
    %v949 = vld [vmem:[%s946 + $0x10] sm:$0xff]
    %v950 = vld [vmem:[%s946 + $0x18] sm:$0xff]
    %v951 = vld [vmem:[%s946 + $0x20] sm:$0xff]
    %v952 = vld [vmem:[%s946 + $0x28] sm:$0xff]
    %953 = vmatprep.subr.mxu0 0.0
    %954 = vmatpush1.msra.mxu0 %v944
    %955 = vmatprep.subr.mxu0 0.0
    %956 = vmatpush1.msra.mxu0 %v945
    %957 = vmatprep.subr.mxu0 0.0
    %958 = vmatpush1.msra.mxu0 0.0
    %959 = vmatprep.subr.mxu0 0.0
    %960 = vmatpush1.msra.mxu0 0.0
    %961 = vmatprep.subr.mxu0 0.0
    %962 = vmatpush1.msra.mxu0 0.0
    %963 = vmatprep.subr.mxu0 0.0
    %964 = vmatpush1.msra.mxu0 0.0
    %965 = vmatprep.subr.mxu0 0.0
    %966 = vmatpush1.msra.mxu0 0.0
    %967 = vmatprep.subr.mxu0 0.0
    %968 = vmatpush1.msra.mxu0 0.0
    %969 = vmatprep.subr.mxu0 0.0
    %970 = vmatpush1.msra.mxu0 0.0
    %971 = vmatprep.subr.mxu0 0.0
    %972 = vmatpush1.msra.mxu0 0.0
    %973 = vmatprep.subr.mxu0 0.0
    %974 = vmatpush1.msra.mxu0 0.0
    %975 = vmatprep.subr.mxu0 0.0
    %976 = vmatpush1.msra.mxu0 0.0
    %977 = vmatprep.subr.mxu0 0.0
    %978 = vmatpush1.msra.mxu0 0.0
    %979 = vmatprep.subr.mxu0 0.0
    %980 = vmatpush1.msra.mxu0 0.0
    %981 = vmatprep.subr.mxu0 0.0
    %982 = vmatpush1.msra.mxu0 0.0
    %983 = vmatprep.subr.mxu0 0.0
    %984 = vmatpush1.msra.mxu0 0.0
    %985 = vmatprep.subr.mxu0 0.0
    %986 = vmatpush1.msra.mxu0 0.0
    %987 = vmatprep.subr.mxu0 0.0
    %988 = vmatpush1.msra.mxu0 0.0
    %989 = vmatprep.subr.mxu0 0.0
    %990 = vmatpush1.msra.mxu0 0.0
    %991 = vmatprep.subr.mxu0 0.0
    %992 = vmatpush1.msra.mxu0 0.0
    %993 = vmatprep.subr.mxu0 0.0
    %994 = vmatpush1.msra.mxu0 0.0
    %995 = vmatprep.subr.mxu0 0.0
    %996 = vmatpush1.msra.mxu0 0.0
    %997 = vmatprep.subr.mxu0 0.0
    %998 = vmatpush1.msra.mxu0 0.0
    %999 = vmatprep.subr.mxu0 0.0
    %1000 = vmatpush1.msra.mxu0 0.0
    %1001 = vmatprep.subr.mxu0 0.0
    %1002 = vmatpush1.msra.mxu0 0.0
    %1003 = vmatprep.subr.mxu0 0.0
    %1004 = vmatpush1.msra.mxu0 0.0
    %1005 = vmatprep.subr.mxu0 0.0
    %1006 = vmatpush1.msra.mxu0 0.0
    %1007 = vmatprep.subr.mxu0 0.0
    %1008 = vmatpush1.msra.mxu0 0.0
    %1009 = vmatprep.subr.mxu0 0.0
    %1010 = vmatpush1.msra.mxu0 0.0
    %1011 = vmatprep.subr.mxu0 0.0
    %1012 = vmatpush1.msra.mxu0 0.0
    %1013 = vmatprep.subr.mxu0 0.0
    %1014 = vmatpush1.msra.mxu0 0.0
    %1015 = vmatprep.subr.mxu0 0.0
    %1016 = vmatpush1.msra.mxu0 0.0
    %1017 = vmatprep.mubr.f32.mxu0 0.0
    %1018 = vmatmul.mubr.f32.gmra.mrb[0].mxu0 %v60
    %v1019 = vpop.f32.mrb[0].mxu0
    %v1020 = vadd.f32 0.0, %v1019
    %v1021 = vpop.f32.mrb[0].mxu0
    %1022 = vmatprep.mubr.f32.mxu0 0.0
    %1023 = vmatmul.mubr.f32.gmra.mrb[0].mxu0 %v63
    %v1024 = vpop.f32.mrb[0].mxu0
    %v1025 = vadd.f32 0.0, %v1024
    %v1026 = vpop.f32.mrb[0].mxu0
    %1027 = vmatprep.mubr.f32.mxu0 0.0
    %1028 = vmatmul.mubr.f32.gmra.mrb[0].mxu0 %v66
    %v1029 = vpop.f32.mrb[0].mxu0
    %v1030 = vadd.f32 0.0, %v1029
    %v1031 = vpop.f32.mrb[0].mxu0
    %1032 = vmatprep.mubr.f32.mxu0 0.0
    %1033 = vmatmul.mubr.f32.gmra.mrb[0].mxu0 %v69
    %v1034 = vpop.f32.mrb[0].mxu0
    %v1035 = vadd.f32 0.0, %v1034
    %v1036 = vpop.f32.mrb[0].mxu0
    %1037 = vmatprep.mubr.f32.mxu0 0.0
    %1038 = vmatmul.mubr.f32.gmra.mrb[0].mxu0 %v72
    %v1039 = vpop.f32.mrb[0].mxu0
    %v1040 = vadd.f32 0.0, %v1039
    %v1041 = vpop.f32.mrb[0].mxu0
    %1042 = vmatprep.mubr.f32.mxu0 0.0
    %1043 = vmatmul.mubr.f32.gmra.mrb[0].mxu0 %v75
    %v1044 = vpop.f32.mrb[0].mxu0
    %v1045 = vadd.f32 0.0, %v1044
    %v1046 = vpop.f32.mrb[0].mxu0
    %1047 = vdwg.mxu0
    %v1048 = vadd.f32 %v947, %v1020
    %v1049 = vadd.f32 %v948, %v1025
    %v1050 = vadd.f32 %v949, %v1030
    %v1051 = vadd.f32 %v950, %v1035
    %v1052 = vxor.u32 %v1048, 2147483648
    %v1053 = vxor.u32 %v1049, 2147483648
    %v1054 = vxor.u32 %v1050, 2147483648
    %v1055 = vxor.u32 %v1051, 2147483648
    %v1056 = vmul.f32 %v1052, 1.442695
    %v1057 = vpow.pop %v1056
    %v1058 = vmul.f32 %v1053, 1.442695
    %v1059 = vpow.pop %v1058
    %v1060 = vmul.f32 %v1054, 1.442695
    %v1061 = vpow.pop %v1060
    %v1062 = vmul.f32 %v1055, 1.442695
    %v1063 = vpow.pop %v1062
    %v1064 = vadd.f32 %v1057, 1.0
    %v1065 = vadd.f32 %v1059, 1.0
    %v1066 = vadd.f32 %v1061, 1.0
    %v1067 = vadd.f32 %v1063, 1.0
    %v1068 = vrcp.pop %v1064
    %v1069 = vmul.f32 1.0, %v1068
    %v1070 = vrcp.pop %v1065
    %v1071 = vmul.f32 1.0, %v1070
    %v1072 = vrcp.pop %v1066
    %v1073 = vmul.f32 1.0, %v1072
    %v1074 = vrcp.pop %v1067
    %v1075 = vmul.f32 1.0, %v1074
    %v1076 = vadd.f32 %v1040, %v45
    %v1077 = vadd.f32 %v1045, %v50
    %v1078 = vmul.f32 %v1069, %v1076
    %v1079 = vmul.f32 %v1071, %v1077
    %v1080 = vadd.f32 %v951, %v1078
    %v1081 = vadd.f32 %v952, %v1079
    %v1082 = vtanh.pop %v1080
    %v1083 = vtanh.pop %v1081
    %v1084 = vsub.f32 1.0, %v1073
    %v1085 = vsub.f32 1.0, %v1075
    %v1086 = vmul.f32 %v1084, %v1082
    %v1087 = vmul.f32 %v1085, %v1083
    %v1088 = vmul.f32 %v1073, %v944
    %v1089 = vmul.f32 %v1075, %v945
    %v1090 = vadd.f32 %v1086, %v1088
    %v1091 = vadd.f32 %v1087, %v1089
    %s1092 = scalar_lea.vmem [#allocation3], 336
    %v1093 = vld [vmem:[%s1092] sm:$0xff]
    %v1094 = vld [vmem:[%s1092 + $0x8] sm:$0xff]
    %v1095 = vld [vmem:[%s1092 + $0x10] sm:$0xff]
    %v1096 = vld [vmem:[%s1092 + $0x18] sm:$0xff]
    %v1097 = vld [vmem:[%s1092 + $0x20] sm:$0xff]
    %v1098 = vld [vmem:[%s1092 + $0x28] sm:$0xff]
    %1099 = vmatprep.subr.mxu0 0.0
    %1100 = vmatpush1.msra.mxu0 %v1090
    %1101 = vmatprep.subr.mxu0 0.0
    %1102 = vmatpush1.msra.mxu0 %v1091
    %1103 = vmatprep.subr.mxu0 0.0
    %1104 = vmatpush1.msra.mxu0 0.0
    %1105 = vmatprep.subr.mxu0 0.0
    %1106 = vmatpush1.msra.mxu0 0.0
    %1107 = vmatprep.subr.mxu0 0.0
    %1108 = vmatpush1.msra.mxu0 0.0
    %1109 = vmatprep.subr.mxu0 0.0
    %1110 = vmatpush1.msra.mxu0 0.0
    %1111 = vmatprep.subr.mxu0 0.0
    %1112 = vmatpush1.msra.mxu0 0.0
    %1113 = vmatprep.subr.mxu0 0.0
    %1114 = vmatpush1.msra.mxu0 0.0
    %1115 = vmatprep.subr.mxu0 0.0
    %1116 = vmatpush1.msra.mxu0 0.0
    %1117 = vmatprep.subr.mxu0 0.0
    %1118 = vmatpush1.msra.mxu0 0.0
    %1119 = vmatprep.subr.mxu0 0.0
    %1120 = vmatpush1.msra.mxu0 0.0
    %1121 = vmatprep.subr.mxu0 0.0
    %1122 = vmatpush1.msra.mxu0 0.0
    %1123 = vmatprep.subr.mxu0 0.0
    %1124 = vmatpush1.msra.mxu0 0.0
    %1125 = vmatprep.subr.mxu0 0.0
    %1126 = vmatpush1.msra.mxu0 0.0
    %1127 = vmatprep.subr.mxu0 0.0
    %1128 = vmatpush1.msra.mxu0 0.0
    %1129 = vmatprep.subr.mxu0 0.0
    %1130 = vmatpush1.msra.mxu0 0.0
    %1131 = vmatprep.subr.mxu0 0.0
    %1132 = vmatpush1.msra.mxu0 0.0
    %1133 = vmatprep.subr.mxu0 0.0
    %1134 = vmatpush1.msra.mxu0 0.0
    %1135 = vmatprep.subr.mxu0 0.0
    %1136 = vmatpush1.msra.mxu0 0.0
    %1137 = vmatprep.subr.mxu0 0.0
    %1138 = vmatpush1.msra.mxu0 0.0
    %1139 = vmatprep.subr.mxu0 0.0
    %1140 = vmatpush1.msra.mxu0 0.0
    %1141 = vmatprep.subr.mxu0 0.0
    %1142 = vmatpush1.msra.mxu0 0.0
    %1143 = vmatprep.subr.mxu0 0.0
    %1144 = vmatpush1.msra.mxu0 0.0
    %1145 = vmatprep.subr.mxu0 0.0
    %1146 = vmatpush1.msra.mxu0 0.0
    %1147 = vmatprep.subr.mxu0 0.0
    %1148 = vmatpush1.msra.mxu0 0.0
    %1149 = vmatprep.subr.mxu0 0.0
    %1150 = vmatpush1.msra.mxu0 0.0
    %1151 = vmatprep.subr.mxu0 0.0
    %1152 = vmatpush1.msra.mxu0 0.0
    %1153 = vmatprep.subr.mxu0 0.0
    %1154 = vmatpush1.msra.mxu0 0.0
    %1155 = vmatprep.subr.mxu0 0.0
    %1156 = vmatpush1.msra.mxu0 0.0
    %1157 = vmatprep.subr.mxu0 0.0
    %1158 = vmatpush1.msra.mxu0 0.0
    %1159 = vmatprep.subr.mxu0 0.0
    %1160 = vmatpush1.msra.mxu0 0.0
    %1161 = vmatprep.subr.mxu0 0.0
    %1162 = vmatpush1.msra.mxu0 0.0
    %1163 = vmatprep.mubr.f32.mxu0 0.0
    %1164 = vmatmul.mubr.f32.gmra.mrb[0].mxu0 %v60
    %v1165 = vpop.f32.mrb[0].mxu0
    %v1166 = vadd.f32 0.0, %v1165
    %v1167 = vpop.f32.mrb[0].mxu0
    %1168 = vmatprep.mubr.f32.mxu0 0.0
    %1169 = vmatmul.mubr.f32.gmra.mrb[0].mxu0 %v63
    %v1170 = vpop.f32.mrb[0].mxu0
    %v1171 = vadd.f32 0.0, %v1170
    %v1172 = vpop.f32.mrb[0].mxu0
    %1173 = vmatprep.mubr.f32.mxu0 0.0
    %1174 = vmatmul.mubr.f32.gmra.mrb[0].mxu0 %v66
    %v1175 = vpop.f32.mrb[0].mxu0
    %v1176 = vadd.f32 0.0, %v1175
    %v1177 = vpop.f32.mrb[0].mxu0
    %1178 = vmatprep.mubr.f32.mxu0 0.0
    %1179 = vmatmul.mubr.f32.gmra.mrb[0].mxu0 %v69
    %v1180 = vpop.f32.mrb[0].mxu0
    %v1181 = vadd.f32 0.0, %v1180
    %v1182 = vpop.f32.mrb[0].mxu0
    %1183 = vmatprep.mubr.f32.mxu0 0.0
    %1184 = vmatmul.mubr.f32.gmra.mrb[0].mxu0 %v72
    %v1185 = vpop.f32.mrb[0].mxu0
    %v1186 = vadd.f32 0.0, %v1185
    %v1187 = vpop.f32.mrb[0].mxu0
    %1188 = vmatprep.mubr.f32.mxu0 0.0
    %1189 = vmatmul.mubr.f32.gmra.mrb[0].mxu0 %v75
    %v1190 = vpop.f32.mrb[0].mxu0
    %v1191 = vadd.f32 0.0, %v1190
    %v1192 = vpop.f32.mrb[0].mxu0
    %1193 = vdwg.mxu0
    %v1194 = vadd.f32 %v1093, %v1166
    %v1195 = vadd.f32 %v1094, %v1171
    %v1196 = vadd.f32 %v1095, %v1176
    %v1197 = vadd.f32 %v1096, %v1181
    %v1198 = vxor.u32 %v1194, 2147483648
    %v1199 = vxor.u32 %v1195, 2147483648
    %v1200 = vxor.u32 %v1196, 2147483648
    %v1201 = vxor.u32 %v1197, 2147483648
    %v1202 = vmul.f32 %v1198, 1.442695
    %v1203 = vpow.pop %v1202
    %v1204 = vmul.f32 %v1199, 1.442695
    %v1205 = vpow.pop %v1204
    %v1206 = vmul.f32 %v1200, 1.442695
    %v1207 = vpow.pop %v1206
    %v1208 = vmul.f32 %v1201, 1.442695
    %v1209 = vpow.pop %v1208
    %v1210 = vadd.f32 %v1203, 1.0
    %v1211 = vadd.f32 %v1205, 1.0
    %v1212 = vadd.f32 %v1207, 1.0
    %v1213 = vadd.f32 %v1209, 1.0
    %v1214 = vrcp.pop %v1210
    %v1215 = vmul.f32 1.0, %v1214
    %v1216 = vrcp.pop %v1211
    %v1217 = vmul.f32 1.0, %v1216
    %v1218 = vrcp.pop %v1212
    %v1219 = vmul.f32 1.0, %v1218
    %v1220 = vrcp.pop %v1213
    %v1221 = vmul.f32 1.0, %v1220
    %v1222 = vadd.f32 %v1186, %v45
    %v1223 = vadd.f32 %v1191, %v50
    %v1224 = vmul.f32 %v1215, %v1222
    %v1225 = vmul.f32 %v1217, %v1223
    %v1226 = vadd.f32 %v1097, %v1224
    %v1227 = vadd.f32 %v1098, %v1225
    %v1228 = vtanh.pop %v1226
    %v1229 = vtanh.pop %v1227
    %v1230 = vsub.f32 1.0, %v1219
    %v1231 = vsub.f32 1.0, %v1221
    %v1232 = vmul.f32 %v1230, %v1228
    %v1233 = vmul.f32 %v1231, %v1229
    %v1234 = vmul.f32 %v1219, %v1090
    %v1235 = vmul.f32 %v1221, %v1091
    %v1236 = vadd.f32 %v1232, %v1234
    %v1237 = vadd.f32 %v1233, %v1235
    %1238 = vset.pattern.permute.xlu0 1
    %1239 = vperm.xlu0 %1238, %v40
    %v1240 = vpop.permute.xlu0 %1239
    %1242 = vset.pattern.permute.xlu0 1
    %1243 = vperm.xlu0 %1242, %v41
    %v1244 = vpop.permute.xlu0 %1243
    %v1246 = vmul.f32 %v1236, %v1240
    %v1247 = vmul.f32 %v1237, %v1244
    %v1248 = vadd.f32 %v1246, %v1247
    %v1249 = vrot.slane %v1248, 4
    %v1250 = vadd.f32 %v1248, %v1249
    %v1251 = vrot.slane %v1250, 2
    %v1252 = vadd.f32 %v1250, %v1251
    %v1253 = vrot.slane %v1252, 1
    %v1254 = vadd.f32 %v1252, %v1253
    %v1255 = vld [vmem:[#allocation2] sm:$0x1]
    %1257 = vset.pattern.permute.xlu0 0
    %1258 = vperm.xlu0 %1257, %v1255
    %v1259 = vpop.permute.xlu0 %1258
    %v1261 = vlaneseq
    %v1262 = vshrl.u32 %v1261, 7
    %v1263 = vsub.s32 0, %v1262
    %v1264 = vrot.slane %v1259, %v1263
    %v1265 = vadd.f32 %v1254, %v1264
    %v1266 = vxor.u32 %v1265, 2147483648
    %v1267 = vmul.f32 %v1266, 1.442695
    %v1268 = vpow.pop %v1267
    %v1269 = vadd.f32 %v1268, 1.0
    %v1270 = vrcp.pop %v1269
    %v1271 = vmul.f32 1.0, %v1270
    %1272 = vst [vmem:[#allocation6] sm:$0x1] %v1271
    // Predicated region
    $region22: #{tpu_custom_call.1} parent=1 // pred_check
      _
    $region23: #{tpu_custom_call.1} parent=1 // pred_check_branch
      %1274 = sbr.rel (0) target = $region25
    $region24: #{tpu_custom_call.1} parent=1 // pred_region
      %s1276 = ssub.s32 16, 16
      %1277 = vsyncadd [#allocation5], %s1276
      %s1279 = sshll.u32 [#allocation6], 4
      %s1280 = int_to_ptr.vmem [resolvable:$true] %s1279
      %1282 = dma.vmem_to_hbm [thread:$0]  %s1280, 16, %s4, [#allocation5]
    $region25: #{tpu_custom_call.1} parent=1 // pred_fallthru
      _
    // Predicated region
    $region26: #{tpu_custom_call.1} parent=1 // pred_check
      _
    $region27: #{tpu_custom_call.1} parent=1 // pred_check_branch
      %1284 = sbr.rel (0) target = $region29
    $region28: #{tpu_custom_call.1} parent=1 // pred_region
      %1285 = dma.done [#allocation5], 16
    $region29: #{tpu_custom_call.1} parent=1 // pred_fallthru
      _
    %1286 = vsyncpa [#allocation4], 1
    %1287 = vsyncpa [#allocation5], 1

</llo_original>
